<compile_context>
chip_gen: v7x
topology: tpu7x:2x2x1
jax: 0.10.0
libtpu: 0.0.40
codegen_flags: <defaults>
</compile_context>

<pallas_src>
import functools

import jax
import jax.numpy as jnp
from jax.experimental import pallas as pl
from jax.experimental.pallas import tpu as pltpu


# Rows of im2col patches per grid step.  bf16 block = TILE_M * 32 * 2 bytes
# (128 KiB at 2048), double-buffered: comfortably under v5e's 16 MiB scoped-VMEM
# default and v7x's 64 MiB physical VMEM, so no vmem_limit override is needed.
_TILE_M_MAX = 2048


def _round_up(x, m):
    return ((x + m - 1) // m) * m


# ----------------------------- Pallas kernels ------------------------------

def _stem_gap_kernel(patch_ref, w_ref, scale_ref, shift_ref, o_ref, acc_ref,
                     *, hw, tile_m):
    """Fused stem conv (im2col matmul) + folded BN + SiLU + global average pool.

    Grid = (B, num_m_tiles).  patch_ref: [1, tile_m, Kp] bf16; w_ref: [Kp, Cp] bf16;
    scale/shift: [1, Cp] f32; o_ref: [1, 1, Cp] f32 pooled features for this batch
    element; acc_ref: [1, Cp] f32 running spatial sum.
    """
    m = pl.program_id(1)

    @pl.when(m == 0)
    def _init():
        acc_ref[...] = jnp.zeros_like(acc_ref)

    # [tile_m, Kp] bf16 x [Kp, Cp] bf16 -> f32 on the MXU
    y = jnp.dot(patch_ref[0], w_ref[...], preferred_element_type=jnp.float32)
    y = y * scale_ref[...] + shift_ref[...]      # folded BatchNorm (conv has no bias)
    y = y * jax.nn.sigmoid(y)                    # SiLU activation

    # Mask rows that exist only because HW was padded up to a tile multiple,
    # then accumulate GAP partial sums.
    row = jax.lax.broadcasted_iota(jnp.int32, y.shape, 0) + m * tile_m
    y = jnp.where(row < hw, y, 0.0)
    acc_ref[...] += jnp.sum(y, axis=0, keepdims=True)

    @pl.when(m == pl.num_programs(1) - 1)
    def _finalize():
        o_ref[...] = (acc_ref[...] * (1.0 / hw)).reshape(o_ref.shape)


def _head_kernel(feat_ref, wc_ref, bc_ref, w1_ref, b1_ref, w2_ref, b2_ref, o_ref):
    """Backbone 1000-way classifier + head MLP, all weights VMEM-resident.

    feat_ref: [B, Cp] f32 pooled features.  Weights are bf16 (padded lane-dense),
    biases f32; all matmuls accumulate in f32.
    """
    f = feat_ref[...].astype(jnp.bfloat16)
    # backbone classifier (the output of `self.base(x)`); x.view(B, -1) is a no-op
    base = jnp.dot(f, wc_ref[...], preferred_element_type=jnp.float32) + bc_ref[...]
    # l1 -> ReLU -> Dropout(0.1, eval: identity) -> l2
    h = jnp.dot(base.astype(jnp.bfloat16), w1_ref[...],
                preferred_element_type=jnp.float32) + b1_ref[...]
    h = jnp.maximum(h, 0.0)
    o_ref[...] = jnp.dot(h.astype(jnp.bfloat16), w2_ref[...],
                         preferred_element_type=jnp.float32) + b2_ref[...]


_VMEM_SPEC = pl.BlockSpec(memory_space=pltpu.MemorySpace.VMEM)


# ------------------------------- glue (JAX) --------------------------------

def _im2col_padded(x_nhwc, k, stride, pad, kp, hwp):
    """kxk patches, K-axis ordered (dy, dx, cin); padded to [B, hwp, kp] bf16."""
    B, H, W, C = x_nhwc.shape
    xp = jnp.pad(x_nhwc, ((0, 0), (pad, pad), (pad, pad), (0, 0)))
    ho = (H + 2 * pad - k) // stride + 1
    wo = (W + 2 * pad - k) // stride + 1
    cols = []
    for dy in range(k):
        for dx in range(k):
            cols.append(xp[:, dy:dy + stride * ho:stride, dx:dx + stride * wo:stride, :])
    patches = jnp.concatenate(cols, axis=-1).reshape(B, ho * wo, k * k * C)
    patches = jnp.pad(patches, ((0, 0), (0, hwp - ho * wo), (0, kp - k * k * C)))
    return patches.astype(jnp.bfloat16)


def init_params(key, num_classes, cin=3, stem_c=48):
    """Deterministic synthetic parameters, pre-padded to hardware-friendly shapes."""
    ks = jax.random.split(key, 8)

    k_real = 3 * 3 * cin                  # 27
    kp = _round_up(k_real, 8)             # 32  (clean sublane/lane handling)
    cp = _round_up(stem_c, 128)           # 128 (lane-dense stem channels)
    n1, n1p = 1000, 1024                  # backbone logits, padded
    n2 = 256
    ncp = _round_up(num_classes, 128)     # padded logits width (slice afterwards)

    def dense(k, fan_in, fan_out):
        return jax.random.normal(k, (fan_in, fan_out), jnp.float32) / jnp.sqrt(float(fan_in))

    # stem conv weight laid out [kh, kw, cin, cout] to match im2col ordering
    w_stem = jax.random.normal(ks[0], (3, 3, cin, stem_c), jnp.float32) * 0.1
    w_stem = w_stem.reshape(k_real, stem_c)
    w_stem_p = jnp.zeros((kp, cp), jnp.float32).at[:k_real, :stem_c].set(w_stem)

    gamma = 1.0 + 0.05 * jax.random.normal(ks[1], (stem_c,), jnp.float32)
    beta = 0.05 * jax.random.normal(ks[2], (stem_c,), jnp.float32)
    mean = 0.05 * jax.random.normal(ks[3], (stem_c,), jnp.float32)
    var = jnp.abs(jax.random.normal(ks[4], (stem_c,), jnp.float32)) + 1.0
    scale = gamma / jnp.sqrt(var + 1e-5)           # fold BN into scale/shift
    shift = beta - mean * scale
    scale_p = jnp.zeros((1, cp), jnp.float32).at[0, :stem_c].set(scale)
    shift_p = jnp.zeros((1, cp), jnp.float32).at[0, :stem_c].set(shift)

    wc = dense(ks[5], stem_c, n1)
    wc_p = jnp.zeros((cp, n1p), jnp.float32).at[:stem_c, :n1].set(wc)
    w1 = dense(ks[6], n1, n2)
    w1_p = jnp.zeros((n1p, n2), jnp.float32).at[:n1, :].set(w1)
    w2 = dense(ks[7], n2, num_classes)
    w2_p = jnp.zeros((n2, ncp), jnp.float32).at[:, :num_classes].set(w2)

    return {
        "w_stem": w_stem_p.astype(jnp.bfloat16),
        "bn_scale": scale_p,
        "bn_shift": shift_p,
        "wc": wc_p.astype(jnp.bfloat16),
        "bc": jnp.zeros((1, n1p), jnp.float32),
        "w1": w1_p.astype(jnp.bfloat16),
        "b1": jnp.zeros((1, n2), jnp.float32),
        "w2": w2_p.astype(jnp.bfloat16),
        "b2": jnp.zeros((1, ncp), jnp.float32),
    }


@functools.partial(jax.jit, static_argnames=("num_classes",))
def efficientnet_b4_transfer(params, x_nchw, *, num_classes):
    """Forward pass. x_nchw: [B, 3, H, W] float32 (NCHW). Returns [B, num_classes]."""
    B = x_nchw.shape[0]
    x = jnp.transpose(x_nchw, (0, 2, 3, 1))        # NCHW -> NHWC
    H, W = x.shape[1], x.shape[2]
    k, stride, pad = 3, 2, 1
    ho = (H + 2 * pad - k) // stride + 1
    wo = (W + 2 * pad - k) // stride + 1
    hw = ho * wo

    kp = params["w_stem"].shape[0]
    cp = params["w_stem"].shape[1]
    n1p = params["wc"].shape[1]
    n2 = params["w1"].shape[1]
    ncp = params["w2"].shape[1]

    tile_m = min(_TILE_M_MAX, _round_up(hw, 8))
    hwp = _round_up(hw, tile_m)
    num_m = hwp // tile_m

    patches = _im2col_padded(x, k, stride, pad, kp, hwp)      # [B, hwp, kp] bf16

    # ---- fused stem conv + BN + SiLU + global average pool ----
    stem_kernel = functools.partial(_stem_gap_kernel, hw=hw, tile_m=tile_m)
    pooled3 = pl.pallas_call(
        stem_kernel,
        out_shape=jax.ShapeDtypeStruct((B, 1, cp), jnp.float32),
        grid_spec=pltpu.PrefetchScalarGridSpec(
            num_scalar_prefetch=0,
            grid=(B, num_m),
            in_specs=[
                pl.BlockSpec((1, tile_m, kp), lambda b, m: (b, m, 0)),
                pl.BlockSpec((kp, cp), lambda b, m: (0, 0)),     # resident weights
                pl.BlockSpec((1, cp), lambda b, m: (0, 0)),
                pl.BlockSpec((1, cp), lambda b, m: (0, 0)),
            ],
            out_specs=pl.BlockSpec((1, 1, cp), lambda b, m: (b, 0, 0)),
            scratch_shapes=[pltpu.VMEM((1, cp), jnp.float32)],
        ),
        compiler_params=pltpu.CompilerParams(
            dimension_semantics=("parallel", "arbitrary")),
    )(patches, params["w_stem"], params["bn_scale"], params["bn_shift"])

    pooled = pooled3[:, 0, :]                                  # [B, cp] f32

    # ---- backbone classifier + head MLP (tiny; single block, weights resident) ----
    logits_p = pl.pallas_call(
        _head_kernel,
        out_shape=jax.ShapeDtypeStruct((B, ncp), jnp.float32),
        in_specs=[_VMEM_SPEC] * 7,
        out_specs=_VMEM_SPEC,
    )(pooled, params["wc"], params["bc"], params["w1"], params["b1"],
      params["w2"], params["b2"])

    return logits_p[:, :num_classes]


# ---------------------------------- main ------------------------------------

if __name__ == "__main__":
    key = jax.random.PRNGKey(0)
    k_params, k_x = jax.random.split(key)

    num_classes = 10
    params = init_params(k_params, num_classes=num_classes)

    # NCHW input, like the PyTorch module (small spatial size for the demo)
    x = jax.random.normal(k_x, (2, 3, 32, 32), jnp.float32)

    out = efficientnet_b4_transfer(params, x, num_classes=num_classes)
    out = jax.block_until_ready(out)

    assert out.shape == (2, num_classes), out.shape
    assert jnp.all(jnp.isfinite(out)), "non-finite output"
    print("KERNEL_OK")
</pallas_src>

<mosaic_0001>
module attributes {stable_mosaic.version = 11 : i64} {
  func.func @_head_kernel(%arg0: memref<2x128xf32, #tpu.memory_space<vmem>>, %arg1: memref<128x1024xbf16, #tpu.memory_space<vmem>>, %arg2: memref<1x1024xf32, #tpu.memory_space<vmem>>, %arg3: memref<1024x256xbf16, #tpu.memory_space<vmem>>, %arg4: memref<1x256xf32, #tpu.memory_space<vmem>>, %arg5: memref<256x128xbf16, #tpu.memory_space<vmem>>, %arg6: memref<1x128xf32, #tpu.memory_space<vmem>>, %arg7: memref<2x128xf32, #tpu.memory_space<vmem>>) attributes {dimension_semantics = [], scalar_prefetch = 0 : i64, scratch_operands = 0 : i64, tpu.core_type = #tpu.core_type<tc>} {
    %c0 = arith.constant 0 : index
    %c0_0 = arith.constant 0 : index
    %0 = vector.load %arg0[%c0, %c0_0] : memref<2x128xf32, #tpu.memory_space<vmem>>, vector<2x128xf32>
    %1 = arith.truncf %0 : vector<2x128xf32> to vector<2x128xbf16>
    %c0_1 = arith.constant 0 : index
    %c0_2 = arith.constant 0 : index
    %2 = vector.load %arg1[%c0_1, %c0_2] : memref<128x1024xbf16, #tpu.memory_space<vmem>>, vector<128x1024xbf16>
    %cst = arith.constant dense<0.000000e+00> : vector<2x1024xf32>
    %3 = tpu.matmul %1, %2, %cst {dimension_numbers = #tpu.dot_dimension_numbers<[1], [0], [0], [1], [0, 0, 1, 1], [], []>} : vector<2x128xbf16>, vector<128x1024xbf16>, vector<2x1024xf32> -> vector<2x1024xf32>
    %c0_3 = arith.constant 0 : index
    %c0_4 = arith.constant 0 : index
    %4 = vector.load %arg2[%c0_3, %c0_4] : memref<1x1024xf32, #tpu.memory_space<vmem>>, vector<1x1024xf32>
    %5 = vector.broadcast %4 : vector<1x1024xf32> to vector<2x1024xf32>
    %6 = arith.addf %3, %5 : vector<2x1024xf32>
    %7 = arith.truncf %6 : vector<2x1024xf32> to vector<2x1024xbf16>
    %c0_5 = arith.constant 0 : index
    %c0_6 = arith.constant 0 : index
    %8 = vector.load %arg3[%c0_5, %c0_6] : memref<1024x256xbf16, #tpu.memory_space<vmem>>, vector<1024x256xbf16>
    %cst_7 = arith.constant dense<0.000000e+00> : vector<2x256xf32>
    %9 = tpu.matmul %7, %8, %cst_7 {dimension_numbers = #tpu.dot_dimension_numbers<[1], [0], [0], [1], [0, 0, 1, 1], [], []>} : vector<2x1024xbf16>, vector<1024x256xbf16>, vector<2x256xf32> -> vector<2x256xf32>
    %c0_8 = arith.constant 0 : index
    %c0_9 = arith.constant 0 : index
    %10 = vector.load %arg4[%c0_8, %c0_9] : memref<1x256xf32, #tpu.memory_space<vmem>>, vector<1x256xf32>
    %11 = vector.broadcast %10 : vector<1x256xf32> to vector<2x256xf32>
    %12 = arith.addf %9, %11 : vector<2x256xf32>
    %cst_10 = arith.constant 0.000000e+00 : f32
    %13 = vector.broadcast %cst_10 : f32 to vector<2x256xf32>
    %14 = arith.maximumf %12, %13 : vector<2x256xf32>
    %15 = arith.truncf %14 : vector<2x256xf32> to vector<2x256xbf16>
    %c0_11 = arith.constant 0 : index
    %c0_12 = arith.constant 0 : index
    %16 = vector.load %arg5[%c0_11, %c0_12] : memref<256x128xbf16, #tpu.memory_space<vmem>>, vector<256x128xbf16>
    %cst_13 = arith.constant dense<0.000000e+00> : vector<2x128xf32>
    %17 = tpu.matmul %15, %16, %cst_13 {dimension_numbers = #tpu.dot_dimension_numbers<[1], [0], [0], [1], [0, 0, 1, 1], [], []>} : vector<2x256xbf16>, vector<256x128xbf16>, vector<2x128xf32> -> vector<2x128xf32>
    %c0_14 = arith.constant 0 : index
    %c0_15 = arith.constant 0 : index
    %18 = vector.load %arg6[%c0_14, %c0_15] : memref<1x128xf32, #tpu.memory_space<vmem>>, vector<1x128xf32>
    %19 = vector.broadcast %18 : vector<1x128xf32> to vector<2x128xf32>
    %20 = arith.addf %17, %19 : vector<2x128xf32>
    %c0_16 = arith.constant 0 : index
    %c0_17 = arith.constant 0 : index
    %21 = vector.load %arg7[%c0_16, %c0_17] : memref<2x128xf32, #tpu.memory_space<vmem>>, vector<2x128xf32>
    tpu.vector_store %arg7[%c0_16, %c0_17], %20 {strides = array<i32>} : memref<2x128xf32, #tpu.memory_space<vmem>>, vector<2x128xf32>,
    return
  }
}

module attributes {stable_mosaic.version = 11 : i64} {
  func.func @_stem_gap_kernel(%arg0: i32, %arg1: i32, %arg2: memref<1x256x32xbf16, #tpu.memory_space<vmem>>, %arg3: memref<32x128xbf16, #tpu.memory_space<vmem>>, %arg4: memref<1x128xf32, #tpu.memory_space<vmem>>, %arg5: memref<1x128xf32, #tpu.memory_space<vmem>>, %arg6: memref<1x1x128xf32, #tpu.memory_space<vmem>>, %arg7: memref<1x128xf32, #tpu.memory_space<vmem>>) attributes {dimension_semantics = [#tpu.dimension_semantics<parallel>, #tpu.dimension_semantics<arbitrary>], iteration_bounds = array<i64: 2, 1>, scalar_prefetch = 0 : i64, scratch_operands = 1 : i64, tpu.core_type = #tpu.core_type<tc>, window_params = [{transform_indices = @transform_0, window_bounds = array<i64: 1, 256, 32>}, {pipeline_mode = #tpu.pipeline_mode<synchronous>, transform_indices = @transform_1, window_bounds = array<i64: 32, 128>}, {pipeline_mode = #tpu.pipeline_mode<synchronous>, transform_indices = @transform_2, window_bounds = array<i64: 1, 128>}, {pipeline_mode = #tpu.pipeline_mode<synchronous>, transform_indices = @transform_3, window_bounds = array<i64: 1, 128>}, {transform_indices = @transform_4, window_bounds = array<i64: 1, 1, 128>}]} {
    %c0_i32 = arith.constant 0 : i32
    %0 = arith.cmpi eq, %arg1, %c0_i32 : i32
    %1 = arith.extui %0 : i1 to i32
    %c0_i32_0 = arith.constant 0 : i32
    %2 = arith.cmpi ne, %1, %c0_i32_0 : i32
    scf.if %2 {
      %cst_19 = arith.constant 0.000000e+00 : f32
      %35 = vector.broadcast %cst_19 : f32 to vector<1x128xf32>
      %c0_20 = arith.constant 0 : index
      %c0_21 = arith.constant 0 : index
      %36 = vector.load %arg7[%c0_20, %c0_21] : memref<1x128xf32, #tpu.memory_space<vmem>>, vector<1x128xf32>
      tpu.vector_store %arg7[%c0_20, %c0_21], %35 {strides = array<i32>} : memref<1x128xf32, #tpu.memory_space<vmem>>, vector<1x128xf32>,
    } else {
    }
    %c0 = arith.constant 0 : index
    %c0_1 = arith.constant 0 : index
    %c0_2 = arith.constant 0 : index
    %3 = vector.load %arg2[%c0, %c0_1, %c0_2] : memref<1x256x32xbf16, #tpu.memory_space<vmem>>, vector<1x256x32xbf16>
    %4 = vector.shape_cast %3 : vector<1x256x32xbf16> to vector<256x32xbf16>
    %c0_3 = arith.constant 0 : index
    %c0_4 = arith.constant 0 : index
    %5 = vector.load %arg3[%c0_3, %c0_4] : memref<32x128xbf16, #tpu.memory_space<vmem>>, vector<32x128xbf16>
    %cst = arith.constant dense<0.000000e+00> : vector<256x128xf32>
    %6 = tpu.matmul %4, %5, %cst {dimension_numbers = #tpu.dot_dimension_numbers<[1], [0], [0], [1], [0, 0, 1, 1], [], []>} : vector<256x32xbf16>, vector<32x128xbf16>, vector<256x128xf32> -> vector<256x128xf32>
    %c0_5 = arith.constant 0 : index
    %c0_6 = arith.constant 0 : index
    %7 = vector.load %arg4[%c0_5, %c0_6] : memref<1x128xf32, #tpu.memory_space<vmem>>, vector<1x128xf32>
    %8 = vector.broadcast %7 : vector<1x128xf32> to vector<256x128xf32>
    %9 = arith.mulf %6, %8 : vector<256x128xf32>
    %c0_7 = arith.constant 0 : index
    %c0_8 = arith.constant 0 : index
    %10 = vector.load %arg5[%c0_7, %c0_8] : memref<1x128xf32, #tpu.memory_space<vmem>>, vector<1x128xf32>
    %11 = vector.broadcast %10 : vector<1x128xf32> to vector<256x128xf32>
    %12 = arith.addf %9, %11 : vector<256x128xf32>
    %13 = arith.negf %12 : vector<256x128xf32>
    %14 = math.exp %13 : vector<256x128xf32>
    %cst_9 = arith.constant 1.000000e+00 : f32
    %15 = vector.broadcast %cst_9 : f32 to vector<256x128xf32>
    %16 = arith.addf %15, %14 : vector<256x128xf32>
    %17 = arith.divf %15, %16 : vector<256x128xf32>
    %18 = arith.mulf %12, %17 : vector<256x128xf32>
    %19 = tpu.iota {dimensions = array<i32: 0>} : vector<256x128xi32>
    %c256_i32 = arith.constant 256 : i32
    %20 = arith.muli %arg1, %c256_i32 : i32
    %21 = vector.broadcast %20 : i32 to vector<256x128xi32>
    %22 = arith.addi %19, %21 : vector<256x128xi32>
    %c256_i32_10 = arith.constant 256 : i32
    %23 = vector.broadcast %c256_i32_10 : i32 to vector<256x128xi32>
    %24 = arith.cmpi slt, %22, %23 : vector<256x128xi32>
    %cst_11 = arith.constant 0.000000e+00 : f32
    %25 = vector.broadcast %cst_11 : f32 to vector<256x128xf32>
    %26 = arith.select %24, %18, %25 : vector<256x128xi1>, vector<256x128xf32>
    %c0_12 = arith.constant 0 : index
    %c0_13 = arith.constant 0 : index
    %27 = vector.load %arg7[%c0_12, %c0_13] : memref<1x128xf32, #tpu.memory_space<vmem>>, vector<1x128xf32>
    %cst_14 = arith.constant dense<0.000000e+00> : vector<128xf32>
    %28 = vector.multi_reduction <add>, %26, %cst_14 [0] : vector<256x128xf32> to vector<128xf32>
    %29 = vector.shape_cast %28 : vector<128xf32> to vector<1x128xf32>
    %30 = arith.addf %27, %29 : vector<1x128xf32>
    %c0_15 = arith.constant 0 : index
    %c0_16 = arith.constant 0 : index
    %31 = vector.load %arg7[%c0_15, %c0_16] : memref<1x128xf32, #tpu.memory_space<vmem>>, vector<1x128xf32>
    tpu.vector_store %arg7[%c0_15, %c0_16], %30 {strides = array<i32>} : memref<1x128xf32, #tpu.memory_space<vmem>>, vector<1x128xf32>,
    %c0_i32_17 = arith.constant 0 : i32
    %32 = arith.cmpi eq, %arg1, %c0_i32_17 : i32
    %33 = arith.extui %32 : i1 to i32
    %c0_i32_18 = arith.constant 0 : i32
    %34 = arith.cmpi ne, %33, %c0_i32_18 : i32
    scf.if %34 {
      %c0_19 = arith.constant 0 : index
      %c0_20 = arith.constant 0 : index
      %35 = vector.load %arg7[%c0_19, %c0_20] : memref<1x128xf32, #tpu.memory_space<vmem>>, vector<1x128xf32>
      %cst_21 = arith.constant 3.906250e-03 : f32
      %36 = vector.broadcast %cst_21 : f32 to vector<1x128xf32>
      %37 = arith.mulf %35, %36 : vector<1x128xf32>
      %38 = vector.shape_cast %37 : vector<1x128xf32> to vector<1x1x128xf32>
      %c0_22 = arith.constant 0 : index
      %c0_23 = arith.constant 0 : index
      %c0_24 = arith.constant 0 : index
      %39 = vector.load %arg6[%c0_22, %c0_23, %c0_24] : memref<1x1x128xf32, #tpu.memory_space<vmem>>, vector<1x1x128xf32>
      tpu.vector_store %arg6[%c0_22, %c0_23, %c0_24], %38 {strides = array<i32>} : memref<1x1x128xf32, #tpu.memory_space<vmem>>, vector<1x1x128xf32>,
    } else {
    }
    return
  }
  func.func @transform_0(%arg0: i32, %arg1: i32) -> (i32, i32, i32) {
    %c0_i32 = arith.constant 0 : i32
    %c0_i32_0 = arith.constant 0 : i32
    return %arg0, %arg1, %c0_i32 : i32, i32, i32
  }
  func.func @transform_1(%arg0: i32, %arg1: i32) -> (i32, i32) {
    %c0_i32 = arith.constant 0 : i32
    %c0_i32_0 = arith.constant 0 : i32
    %c0_i32_1 = arith.constant 0 : i32
    return %c0_i32, %c0_i32_0 : i32, i32
  }
  func.func @transform_2(%arg0: i32, %arg1: i32) -> (i32, i32) {
    %c0_i32 = arith.constant 0 : i32
    %c0_i32_0 = arith.constant 0 : i32
    %c0_i32_1 = arith.constant 0 : i32
    return %c0_i32, %c0_i32_0 : i32, i32
  }
  func.func @transform_3(%arg0: i32, %arg1: i32) -> (i32, i32) {
    %c0_i32 = arith.constant 0 : i32
    %c0_i32_0 = arith.constant 0 : i32
    %c0_i32_1 = arith.constant 0 : i32
    return %c0_i32, %c0_i32_0 : i32, i32
  }
  func.func @transform_4(%arg0: i32, %arg1: i32) -> (i32, i32, i32) {
    %c0_i32 = arith.constant 0 : i32
    %c0_i32_0 = arith.constant 0 : i32
    %c0_i32_1 = arith.constant 0 : i32
    return %arg0, %c0_i32, %c0_i32_0 : i32, i32, i32
  }
}

</mosaic_0001>

<llo_original>
// kernel: efficientnet_b4_transfer.2
$region0: #{efficientnet_b4_transfer.2}
  #allocation0 [shape = 'u32[]', space=smem, size = 0x4, offset = 0x4, fixed_abs, tag = 'smem constant byte address 0x4 - core index']
  #allocation1 [shape = 'u32[144,128]{1,0:T(1,128)}', space=vmem, size = 0x12000, scoped, tag = 'internal scratch']
  #allocation2 [shape = 'f32[1,128]{1,0:T(1,128)}', space=vmem, size = 0x200, scoped, tag = 'scratch operand']
  %s0 = inlined_call_operand.vmem [shape: bf16[2,256,32], index: 0, kind: input, shape index: {}]
  %s1 = inlined_call_operand.vmem [shape: bf16[32,128], index: 1, kind: input, shape index: {}]
  %s2 = inlined_call_operand.vmem [shape: f32[1,128], index: 2, kind: input, shape index: {}]
  %s3 = inlined_call_operand.vmem [shape: f32[1,128], index: 3, kind: input, shape index: {}]
  %s4 = inlined_call_operand.vmem [shape: f32[2,1,128], index: 4, kind: output, shape index: {}]
  %s5 = sld [smem:[#allocation0]]
  $region57: #{efficientnet_b4_transfer.2} parent=0
    _
  %s7 = ssub.s32 1, %s5
  %s8 = scalar_select 0, %s7, %s5
  loop: start=0, step=1, limit=4
  $region2: #{efficientnet_b4_transfer.2} parent=0 // loop_pre_header
    _
  $region3: #{efficientnet_b4_transfer.2} parent=0 // loop_header
    %s10 = sphi 0, %s14
    %p11 = scmp.ge.s32.totalorder %s10, 4
    %s17 = sphi 0, %s29
    %s18 = sphi 0, %s25
    %s19 = sphi 0, %s17
    %s20 = sphi 0, %s18
    %s21 = sphi 0, %s19
    %s22 = sphi 0, %s20
    %s34 = sphi 0, %s36
    %s37 = sphi 0, %s34
    %s38 = sphi 0, %s37
    %s54 = sphi 0, %s38
    %s58 = sphi 0, %s58
    %s60 = sphi 0, %s58
    %s61 = sphi 0, %s60
    %s75 = sphi 0, %s61
    %s79 = sphi 0, %s79
    %s81 = sphi 0, %s79
    %s82 = sphi 0, %s81
    %s96 = sphi 0, %s82
    %s100 = sphi 0, %s100
    %s102 = sphi 0, %s100
    %s103 = sphi 0, %s102
    %s117 = sphi 0, %s103
    %s123 = sphi 0, %s125
    %s126 = sphi 0, %s123
    %s127 = sphi 0, %s126
    %s143 = sphi 0, %s127
  $region4: #{efficientnet_b4_transfer.2} parent=0 // loop_header_branch
    %13 = sbr.rel (%p11) target = $region8
  $region5: #{efficientnet_b4_transfer.2} parent=0 // loop_body
    %s15 = ssub.s32 %s10, 1
    %s16 = ssub.s32 %s10, 2
    %s23 = sadd.s32 1, %s18
    %p24 = scmp.ge.s32.totalorder %s23, 1
    %s25 = scalar_select %p24, 0, %s23
    %s26 = sadd.s32 1, %s17
    %s27 = scalar_select %p24, %s26, %s17
    %p28 = scmp.ge.s32.totalorder %s27, 2
    %s29 = scalar_select %p28, 0, %s27
    %s30 = ssub.s32 %s17, %s29
    %s31 = ssub.s32 %s18, %s25
    %s32 = sor.u32 %s30, %s31
    %p33 = scmp.eq.s32.totalorder %s32, 0
    %s35 = sadd.s32 %s34, 1
    %s36 = scalar_select %p33, %s34, %s35
    %p39 = pneg %p33
    %p40 = scmp.eq.s32.totalorder %s10, 1
    %p41 = por %p39, %p40
    %p42 = scmp.ne.s32.totalorder %s34, %s37
    %p43 = scmp.eq.s32.totalorder %s10, 0
    %p44 = por %p42, %p43
    %p45 = scmp.ne.s32.totalorder %s34, %s37
    %p46 = scmp.eq.s32.totalorder %s15, 1
    %p47 = por %p45, %p46
    %p48 = scmp.ne.s32.totalorder %s37, %s38
    %p49 = scmp.eq.s32.totalorder %s15, 0
    %p50 = por %p48, %p49
    %p51 = scmp.ne.s32.totalorder %s37, %s38
    %p52 = scmp.eq.s32.totalorder %s16, 1
    %p53 = por %p51, %p52
    %p55 = scmp.ne.s32.totalorder %s38, %s54
    %p56 = scmp.eq.s32.totalorder %s16, 0
    %p57 = por %p55, %p56
    %s59 = sadd.s32 %s58, 1
    %p62 = scmp.eq.s32.totalorder %s10, 1
    %p63 = scmp.ne.s32.totalorder %s58, %s60
    %p64 = scmp.eq.s32.totalorder %s10, 0
    %p65 = por %p63, %p64
    %p66 = scmp.ne.s32.totalorder %s58, %s60
    %p67 = scmp.eq.s32.totalorder %s15, 1
    %p68 = por %p66, %p67
    %p69 = scmp.ne.s32.totalorder %s60, %s61
    %p70 = scmp.eq.s32.totalorder %s15, 0
    %p71 = por %p69, %p70
    %p72 = scmp.ne.s32.totalorder %s60, %s61
    %p73 = scmp.eq.s32.totalorder %s16, 1
    %p74 = por %p72, %p73
    %p76 = scmp.ne.s32.totalorder %s61, %s75
    %p77 = scmp.eq.s32.totalorder %s16, 0
    %p78 = por %p76, %p77
    %s80 = sadd.s32 %s79, 1
    %p83 = scmp.eq.s32.totalorder %s10, 1
    %p84 = scmp.ne.s32.totalorder %s79, %s81
    %p85 = scmp.eq.s32.totalorder %s10, 0
    %p86 = por %p84, %p85
    %p87 = scmp.ne.s32.totalorder %s79, %s81
    %p88 = scmp.eq.s32.totalorder %s15, 1
    %p89 = por %p87, %p88
    %p90 = scmp.ne.s32.totalorder %s81, %s82
    %p91 = scmp.eq.s32.totalorder %s15, 0
    %p92 = por %p90, %p91
    %p93 = scmp.ne.s32.totalorder %s81, %s82
    %p94 = scmp.eq.s32.totalorder %s16, 1
    %p95 = por %p93, %p94
    %p97 = scmp.ne.s32.totalorder %s82, %s96
    %p98 = scmp.eq.s32.totalorder %s16, 0
    %p99 = por %p97, %p98
    %s101 = sadd.s32 %s100, 1
    %p104 = scmp.eq.s32.totalorder %s10, 1
    %p105 = scmp.ne.s32.totalorder %s100, %s102
    %p106 = scmp.eq.s32.totalorder %s10, 0
    %p107 = por %p105, %p106
    %p108 = scmp.ne.s32.totalorder %s100, %s102
    %p109 = scmp.eq.s32.totalorder %s15, 1
    %p110 = por %p108, %p109
    %p111 = scmp.ne.s32.totalorder %s102, %s103
    %p112 = scmp.eq.s32.totalorder %s15, 0
    %p113 = por %p111, %p112
    %p114 = scmp.ne.s32.totalorder %s102, %s103
    %p115 = scmp.eq.s32.totalorder %s16, 1
    %p116 = por %p114, %p115
    %p118 = scmp.ne.s32.totalorder %s103, %s117
    %p119 = scmp.eq.s32.totalorder %s16, 0
    %p120 = por %p118, %p119
    %s121 = ssub.s32 %s17, %s29
    %p122 = scmp.eq.s32.totalorder %s121, 0
    %s124 = sadd.s32 %s123, 1
    %s125 = scalar_select %p122, %s123, %s124
    %p128 = pneg %p122
    %p129 = scmp.eq.s32.totalorder %s10, 1
    %p130 = por %p128, %p129
    %p131 = scmp.ne.s32.totalorder %s123, %s126
    %p132 = scmp.eq.s32.totalorder %s10, 0
    %p133 = por %p131, %p132
    %p134 = scmp.ne.s32.totalorder %s123, %s126
    %p135 = scmp.eq.s32.totalorder %s15, 1
    %p136 = por %p134, %p135
    %p137 = scmp.ne.s32.totalorder %s126, %s127
    %p138 = scmp.eq.s32.totalorder %s15, 0
    %p139 = por %p137, %p138
    %p140 = scmp.ne.s32.totalorder %s126, %s127
    %p141 = scmp.eq.s32.totalorder %s16, 1
    %p142 = por %p140, %p141
    %p144 = scmp.ne.s32.totalorder %s127, %s143
    %p145 = scmp.eq.s32.totalorder %s16, 0
    %p146 = por %p144, %p145
    %p147 = scmp.le.s32.totalorder 1, %s10
    %p148 = scmp.lt.s32.totalorder %s10, 3
    %p149 = pnand %p147, %p148
    %p150 = pneg %p149
    // Predicated region
    $region9: #{efficientnet_b4_transfer.2} parent=5 // pred_check
      _
    $region10: #{efficientnet_b4_transfer.2} parent=5 // pred_check_branch
      %152 = sbr.rel (%p149) target = $region12
    $region11: #{efficientnet_b4_transfer.2} parent=5 // pred_region
      %s153 = ssub.s32 %s10, 1
      // Predicated region
      $region13: #{efficientnet_b4_transfer.2} parent=11 // pred_check
        %p154 = pneg %p71
      $region14: #{efficientnet_b4_transfer.2} parent=11 // pred_check_branch
        %156 = sbr.rel (%p154) target = $region16
      $region15: #{efficientnet_b4_transfer.2} parent=11 // pred_region
        _
      $region16: #{efficientnet_b4_transfer.2} parent=11 // pred_fallthru
        _
      // Predicated region
      $region17: #{efficientnet_b4_transfer.2} parent=11 // pred_check
        %p157 = pneg %p92
      $region18: #{efficientnet_b4_transfer.2} parent=11 // pred_check_branch
        %159 = sbr.rel (%p157) target = $region20
      $region19: #{efficientnet_b4_transfer.2} parent=11 // pred_region
        _
      $region20: #{efficientnet_b4_transfer.2} parent=11 // pred_fallthru
        _
      // Predicated region
      $region21: #{efficientnet_b4_transfer.2} parent=11 // pred_check
        %p160 = pneg %p113
      $region22: #{efficientnet_b4_transfer.2} parent=11 // pred_check_branch
        %162 = sbr.rel (%p160) target = $region24
      $region23: #{efficientnet_b4_transfer.2} parent=11 // pred_region
        _
      $region24: #{efficientnet_b4_transfer.2} parent=11 // pred_fallthru
        _
    $region12: #{efficientnet_b4_transfer.2} parent=5 // pred_fallthru
      _
    %p163 = scmp.lt.s32.totalorder %s10, 2
    // Predicated region
    $region25: #{efficientnet_b4_transfer.2} parent=5 // pred_check
      %p164 = pneg %p163
    $region26: #{efficientnet_b4_transfer.2} parent=5 // pred_check_branch
      %166 = sbr.rel (%p164) target = $region28
    $region27: #{efficientnet_b4_transfer.2} parent=5 // pred_region
      // Predicated region
      $region29: #{efficientnet_b4_transfer.2} parent=27 // pred_check
        %p167 = pneg %p44
      $region30: #{efficientnet_b4_transfer.2} parent=27 // pred_check_branch
        %169 = sbr.rel (%p167) target = $region32
      $region31: #{efficientnet_b4_transfer.2} parent=27 // pred_region
        %s170 = smul.u32 32, %s18
        %p171 = scmp.lt.s32.totalorder %s17, 1
        %s172 = scalar_select %p171, %s17, 1
        %p173 = scmp.lt.s32.totalorder %s170, 31
        %s174 = scalar_select %p173, %s170, 31
        %s175 = smul.addr %s172, 32
        %s176 = sadd.s32 %s174, %s175
        %s177 = smul.addr %s176, 4
        %s178 = scalar_lea.vmem %s0, %s177
        %s179 = smul.u32 32, %s18
      $region32: #{efficientnet_b4_transfer.2} parent=27 // pred_fallthru
        _
    $region28: #{efficientnet_b4_transfer.2} parent=5 // pred_fallthru
      _
    %p180 = scmp.le.s32.totalorder 1, %s10
    %p181 = scmp.lt.s32.totalorder %s10, 3
    %p182 = pnand %p180, %p181
    %p183 = pneg %p182
    // Predicated region
    $region33: #{efficientnet_b4_transfer.2} parent=5 // pred_check
      _
    $region34: #{efficientnet_b4_transfer.2} parent=5 // pred_check_branch
      %185 = sbr.rel (%p182) target = $region36
    $region35: #{efficientnet_b4_transfer.2} parent=5 // pred_region
      %s186 = ssub.s32 %s10, 1
      %s187 = smul.u32 32, %s20
      %p188 = scmp.lt.s32.totalorder %s19, 1
      %s189 = scalar_select %p188, %s19, 1
      %p190 = scmp.lt.s32.totalorder %s187, 31
      %s191 = scalar_select %p190, %s187, 31
      %s192 = smul.addr %s189, 32
      %s193 = sadd.s32 %s191, %s192
      %s194 = smul.addr %s193, 4
      %s195 = scalar_lea.vmem %s0, %s194
      %p196 = pneg %p50
      %p197 = pneg %p47
      %p198 = pneg %p71
      %p199 = pneg %p68
      %p200 = pneg %p92
      %p201 = pneg %p89
      %p202 = pneg %p113
      %p203 = pneg %p110
      %p204 = pneg %p139
      %p205 = pneg %p136
      %p206 = scmp.lt.s32.totalorder %s19, 1
      %s207 = scalar_select %p206, %s19, 1
      %s208 = scalar_lea.vmem %s4, %s207
      %s209 = smul.u32 32, %s20
      %p210 = scmp.lt.s32.totalorder %s19, 1
      %s211 = scalar_select %p210, %s19, 1
      %p212 = scmp.lt.s32.totalorder %s209, 31
      %s213 = scalar_select %p212, %s209, 31
      %s214 = smul.addr %s211, 32
      %s215 = sadd.s32 %s213, %s214
      %s216 = smul.addr %s215, 4
      %s217 = scalar_lea.vmem %s0, %s216
      %s218 = smul.u32 32, %s20
      %p219 = scmp.lt.s32.totalorder %s19, 1
      %s220 = scalar_select %p219, %s19, 1
      %s221 = scalar_lea.vmem %s4, %s220
      %p223 = scmp.eq.s32.totalorder %s20, 0
      // Predicated region
      $region37: #{efficientnet_b4_transfer.2} parent=35 // pred_check
        %p224 = pneg %p223
      $region38: #{efficientnet_b4_transfer.2} parent=35 // pred_check_branch
        %226 = sbr.rel (%p224) target = $region40
      $region39: #{efficientnet_b4_transfer.2} parent=35 // pred_region
        %227 = vst [vmem:[#allocation2] sm:$0x1] 0.0
      $region40: #{efficientnet_b4_transfer.2} parent=35 // pred_fallthru
        _
      %v228 = vld [vmem:[%s217] sm:$0xf]
      %v229 = vld [vmem:[%s217 + $0x4] sm:$0xf]
      %v230 = vld [vmem:[%s217 + $0x8] sm:$0xf]
      %v231 = vld [vmem:[%s217 + $0xc] sm:$0xf]
      %v232 = vld [vmem:[%s217 + $0x10] sm:$0xf]
      %v233 = vld [vmem:[%s217 + $0x14] sm:$0xf]
      %v234 = vld [vmem:[%s217 + $0x18] sm:$0xf]
      %v235 = vld [vmem:[%s217 + $0x1c] sm:$0xf]
      %v236 = vld [vmem:[%s217 + $0x20] sm:$0xf]
      %v237 = vld [vmem:[%s217 + $0x24] sm:$0xf]
      %v238 = vld [vmem:[%s217 + $0x28] sm:$0xf]
      %v239 = vld [vmem:[%s217 + $0x2c] sm:$0xf]
      %v240 = vld [vmem:[%s217 + $0x30] sm:$0xf]
      %v241 = vld [vmem:[%s217 + $0x34] sm:$0xf]
      %v242 = vld [vmem:[%s217 + $0x38] sm:$0xf]
      %v243 = vld [vmem:[%s217 + $0x3c] sm:$0xf]
      %v244 = vld [vmem:[%s217 + $0x40] sm:$0xf]
      %v245 = vld [vmem:[%s217 + $0x44] sm:$0xf]
      %v246 = vld [vmem:[%s217 + $0x48] sm:$0xf]
      %v247 = vld [vmem:[%s217 + $0x4c] sm:$0xf]
      %v248 = vld [vmem:[%s217 + $0x50] sm:$0xf]
      %v249 = vld [vmem:[%s217 + $0x54] sm:$0xf]
      %v250 = vld [vmem:[%s217 + $0x58] sm:$0xf]
      %v251 = vld [vmem:[%s217 + $0x5c] sm:$0xf]
      %v252 = vld [vmem:[%s217 + $0x60] sm:$0xf]
      %v253 = vld [vmem:[%s217 + $0x64] sm:$0xf]
      %v254 = vld [vmem:[%s217 + $0x68] sm:$0xf]
      %v255 = vld [vmem:[%s217 + $0x6c] sm:$0xf]
      %v256 = vld [vmem:[%s217 + $0x70] sm:$0xf]
      %v257 = vld [vmem:[%s217 + $0x74] sm:$0xf]
      %v258 = vld [vmem:[%s217 + $0x78] sm:$0xf]
      %v259 = vld [vmem:[%s217 + $0x7c] sm:$0xf]
      %v260 = vld [vmem:[%s1] sm:$0xf]
      %v261 = vld [vmem:[%s1 + $0x4] sm:$0xf]
      %v262 = vld [vmem:[%s1 + $0x8] sm:$0xf]
      %v263 = vld [vmem:[%s1 + $0xc] sm:$0xf]
      %v296 = vunpack.c.l.b16 %v228
      %v297 = vunpack.c.l.b16 %v229
      %v298 = vunpack.c.l.b16 %v230
      %v299 = vunpack.c.l.b16 %v231
      %v300 = vunpack.c.l.b16 %v232
      %v301 = vunpack.c.l.b16 %v233
      %v302 = vunpack.c.l.b16 %v234
      %v303 = vunpack.c.l.b16 %v235
      %v304 = vunpack.c.l.b16 %v236
      %v305 = vunpack.c.l.b16 %v237
      %v306 = vunpack.c.l.b16 %v238
      %v307 = vunpack.c.l.b16 %v239
      %v308 = vunpack.c.l.b16 %v240
      %v309 = vunpack.c.l.b16 %v241
      %v310 = vunpack.c.l.b16 %v242
      %v311 = vunpack.c.l.b16 %v243
      %v312 = vunpack.c.l.b16 %v244
      %v313 = vunpack.c.l.b16 %v245
      %v314 = vunpack.c.l.b16 %v246
      %v315 = vunpack.c.l.b16 %v247
      %v316 = vunpack.c.l.b16 %v248
      %v317 = vunpack.c.l.b16 %v249
      %v318 = vunpack.c.l.b16 %v250
      %v319 = vunpack.c.l.b16 %v251
      %v320 = vunpack.c.l.b16 %v252
      %v321 = vunpack.c.l.b16 %v253
      %v322 = vunpack.c.l.b16 %v254
      %v323 = vunpack.c.l.b16 %v255
      %v324 = vunpack.c.l.b16 %v256
      %v325 = vunpack.c.l.b16 %v257
      %v326 = vunpack.c.l.b16 %v258
      %v327 = vunpack.c.l.b16 %v259
      %v328 = vpack.c.b16 %v297, %v296
      %v329 = vpack.c.b16 %v299, %v298
      %v330 = vpack.c.b16 %v301, %v300
      %v331 = vpack.c.b16 %v303, %v302
      %v332 = vpack.c.b16 %v305, %v304
      %v333 = vpack.c.b16 %v307, %v306
      %v334 = vpack.c.b16 %v309, %v308
      %v335 = vpack.c.b16 %v311, %v310
      %v336 = vpack.c.b16 %v313, %v312
      %v337 = vpack.c.b16 %v315, %v314
      %v338 = vpack.c.b16 %v317, %v316
      %v339 = vpack.c.b16 %v319, %v318
      %v340 = vpack.c.b16 %v321, %v320
      %v341 = vpack.c.b16 %v323, %v322
      %v342 = vpack.c.b16 %v325, %v324
      %v343 = vpack.c.b16 %v327, %v326
      %v348 = vunpack.c.l.b16 %v260
      %v349 = vunpack.c.l.b16 %v261
      %v350 = vunpack.c.l.b16 %v262
      %v351 = vunpack.c.l.b16 %v263
      %v352 = vpack.c.b16 %v349, %v348
      %v353 = vpack.c.b16 %v351, %v350
      %vm356 = vcmask 261120
      %v358 = vsel %vm356, %v328, 0
      %v361 = vsel %vm356, %v329, 0
      %v364 = vsel %vm356, %v330, 0
      %v367 = vsel %vm356, %v331, 0
      %v370 = vsel %vm356, %v332, 0
      %v373 = vsel %vm356, %v333, 0
      %v376 = vsel %vm356, %v334, 0
      %v379 = vsel %vm356, %v335, 0
      %v382 = vsel %vm356, %v336, 0
      %v385 = vsel %vm356, %v337, 0
      %v388 = vsel %vm356, %v338, 0
      %v391 = vsel %vm356, %v339, 0
      %v394 = vsel %vm356, %v340, 0
      %v397 = vsel %vm356, %v341, 0
      %v400 = vsel %vm356, %v342, 0
      %v403 = vsel %vm356, %v343, 0
      %405 = vmatprep.subr.bf16.mxu0 0
      %406 = vmatpush1.bf16.msra.mxu0 %v352
      %407 = vmatprep.subr.bf16.mxu0 0
      %408 = vmatpush1.bf16.msra.mxu0 %v353
      %409 = vmatprep.subr.bf16.mxu0 0
      %410 = vmatpush1.bf16.msra.mxu0 0
      %411 = vmatprep.subr.bf16.mxu0 0
      %412 = vmatpush1.bf16.msra.mxu0 0
      %413 = vmatprep.subr.bf16.mxu0 0
      %414 = vmatpush1.bf16.msra.mxu0 0
      %415 = vmatprep.subr.bf16.mxu0 0
      %416 = vmatpush1.bf16.msra.mxu0 0
      %417 = vmatprep.subr.bf16.mxu0 0
      %418 = vmatpush1.bf16.msra.mxu0 0
      %419 = vmatprep.subr.bf16.mxu0 0
      %420 = vmatpush1.bf16.msra.mxu0 0
      %421 = vmatprep.subr.bf16.mxu0 0
      %422 = vmatpush1.bf16.msra.mxu0 0
      %423 = vmatprep.subr.bf16.mxu0 0
      %424 = vmatpush1.bf16.msra.mxu0 0
      %425 = vmatprep.subr.bf16.mxu0 0
      %426 = vmatpush1.bf16.msra.mxu0 0
      %427 = vmatprep.subr.bf16.mxu0 0
      %428 = vmatpush1.bf16.msra.mxu0 0
      %429 = vmatprep.subr.bf16.mxu0 0
      %430 = vmatpush1.bf16.msra.mxu0 0
      %431 = vmatprep.subr.bf16.mxu0 0
      %432 = vmatpush1.bf16.msra.mxu0 0
      %433 = vmatprep.subr.bf16.mxu0 0
      %434 = vmatpush1.bf16.msra.mxu0 0
      %435 = vmatprep.subr.bf16.mxu0 0
      %436 = vmatpush1.bf16.msra.mxu0 0
      %437 = vmatprep.mubr.bf16.mxu0 0
      %438 = vmatmul.mubr.bf16.gmra.mrb[0].mxu0 %v358
      %v439 = vpop.f32.mrb[0].mxu0
      %v440 = vadd.f32 0.0, %v439
      %v441 = vpop.f32.mrb[0].mxu0
      %v442 = vpop.f32.mrb[0].mxu0
      %v443 = vadd.f32 0.0, %v442
      %v444 = vpop.f32.mrb[0].mxu0
      %445 = vmatprep.mubr.bf16.mxu0 0
      %446 = vmatmul.mubr.bf16.gmra.mrb[0].mxu0 %v361
      %v447 = vpop.f32.mrb[0].mxu0
      %v448 = vadd.f32 0.0, %v447
      %v449 = vpop.f32.mrb[0].mxu0
      %v450 = vpop.f32.mrb[0].mxu0
      %v451 = vadd.f32 0.0, %v450
      %v452 = vpop.f32.mrb[0].mxu0
      %453 = vmatprep.mubr.bf16.mxu0 0
      %454 = vmatmul.mubr.bf16.gmra.mrb[0].mxu0 %v364
      %v455 = vpop.f32.mrb[0].mxu0
      %v456 = vadd.f32 0.0, %v455
      %v457 = vpop.f32.mrb[0].mxu0
      %v458 = vpop.f32.mrb[0].mxu0
      %v459 = vadd.f32 0.0, %v458
      %v460 = vpop.f32.mrb[0].mxu0
      %461 = vmatprep.mubr.bf16.mxu0 0
      %462 = vmatmul.mubr.bf16.gmra.mrb[0].mxu0 %v367
      %v463 = vpop.f32.mrb[0].mxu0
      %v464 = vadd.f32 0.0, %v463
      %v465 = vpop.f32.mrb[0].mxu0
      %v466 = vpop.f32.mrb[0].mxu0
      %v467 = vadd.f32 0.0, %v466
      %v468 = vpop.f32.mrb[0].mxu0
      %469 = vmatprep.mubr.bf16.mxu0 0
      %470 = vmatmul.mubr.bf16.gmra.mrb[0].mxu0 %v370
      %v471 = vpop.f32.mrb[0].mxu0
      %v472 = vadd.f32 0.0, %v471
      %v473 = vpop.f32.mrb[0].mxu0
      %v474 = vpop.f32.mrb[0].mxu0
      %v475 = vadd.f32 0.0, %v474
      %v476 = vpop.f32.mrb[0].mxu0
      %477 = vmatprep.mubr.bf16.mxu0 0
      %478 = vmatmul.mubr.bf16.gmra.mrb[0].mxu0 %v373
      %v479 = vpop.f32.mrb[0].mxu0
      %v480 = vadd.f32 0.0, %v479
      %v481 = vpop.f32.mrb[0].mxu0
      %v482 = vpop.f32.mrb[0].mxu0
      %v483 = vadd.f32 0.0, %v482
      %v484 = vpop.f32.mrb[0].mxu0
      %485 = vmatprep.mubr.bf16.mxu0 0
      %486 = vmatmul.mubr.bf16.gmra.mrb[0].mxu0 %v376
      %v487 = vpop.f32.mrb[0].mxu0
      %v488 = vadd.f32 0.0, %v487
      %v489 = vpop.f32.mrb[0].mxu0
      %v490 = vpop.f32.mrb[0].mxu0
      %v491 = vadd.f32 0.0, %v490
      %v492 = vpop.f32.mrb[0].mxu0
      %493 = vmatprep.mubr.bf16.mxu0 0
      %494 = vmatmul.mubr.bf16.gmra.mrb[0].mxu0 %v379
      %v495 = vpop.f32.mrb[0].mxu0
      %v496 = vadd.f32 0.0, %v495
      %v497 = vpop.f32.mrb[0].mxu0
      %v498 = vpop.f32.mrb[0].mxu0
      %v499 = vadd.f32 0.0, %v498
      %v500 = vpop.f32.mrb[0].mxu0
      %501 = vmatprep.mubr.bf16.mxu0 0
      %502 = vmatmul.mubr.bf16.gmra.mrb[0].mxu0 %v382
      %v503 = vpop.f32.mrb[0].mxu0
      %v504 = vadd.f32 0.0, %v503
      %v505 = vpop.f32.mrb[0].mxu0
      %v506 = vpop.f32.mrb[0].mxu0
      %v507 = vadd.f32 0.0, %v506
      %v508 = vpop.f32.mrb[0].mxu0
      %509 = vmatprep.mubr.bf16.mxu0 0
      %510 = vmatmul.mubr.bf16.gmra.mrb[0].mxu0 %v385
      %v511 = vpop.f32.mrb[0].mxu0
      %v512 = vadd.f32 0.0, %v511
      %v513 = vpop.f32.mrb[0].mxu0
      %v514 = vpop.f32.mrb[0].mxu0
      %v515 = vadd.f32 0.0, %v514
      %v516 = vpop.f32.mrb[0].mxu0
      %517 = vmatprep.mubr.bf16.mxu0 0
      %518 = vmatmul.mubr.bf16.gmra.mrb[0].mxu0 %v388
      %v519 = vpop.f32.mrb[0].mxu0
      %v520 = vadd.f32 0.0, %v519
      %v521 = vpop.f32.mrb[0].mxu0
      %v522 = vpop.f32.mrb[0].mxu0
      %v523 = vadd.f32 0.0, %v522
      %v524 = vpop.f32.mrb[0].mxu0
      %525 = vmatprep.mubr.bf16.mxu0 0
      %526 = vmatmul.mubr.bf16.gmra.mrb[0].mxu0 %v391
      %v527 = vpop.f32.mrb[0].mxu0
      %v528 = vadd.f32 0.0, %v527
      %v529 = vpop.f32.mrb[0].mxu0
      %v530 = vpop.f32.mrb[0].mxu0
      %v531 = vadd.f32 0.0, %v530
      %v532 = vpop.f32.mrb[0].mxu0
      %533 = vmatprep.mubr.bf16.mxu0 0
      %534 = vmatmul.mubr.bf16.gmra.mrb[0].mxu0 %v394
      %v535 = vpop.f32.mrb[0].mxu0
      %v536 = vadd.f32 0.0, %v535
      %v537 = vpop.f32.mrb[0].mxu0
      %v538 = vpop.f32.mrb[0].mxu0
      %v539 = vadd.f32 0.0, %v538
      %v540 = vpop.f32.mrb[0].mxu0
      %541 = vmatprep.mubr.bf16.mxu0 0
      %542 = vmatmul.mubr.bf16.gmra.mrb[0].mxu0 %v397
      %v543 = vpop.f32.mrb[0].mxu0
      %v544 = vadd.f32 0.0, %v543
      %v545 = vpop.f32.mrb[0].mxu0
      %v546 = vpop.f32.mrb[0].mxu0
      %v547 = vadd.f32 0.0, %v546
      %v548 = vpop.f32.mrb[0].mxu0
      %549 = vmatprep.mubr.bf16.mxu0 0
      %550 = vmatmul.mubr.bf16.gmra.mrb[0].mxu0 %v400
      %v551 = vpop.f32.mrb[0].mxu0
      %v552 = vadd.f32 0.0, %v551
      %v553 = vpop.f32.mrb[0].mxu0
      %v554 = vpop.f32.mrb[0].mxu0
      %v555 = vadd.f32 0.0, %v554
      %v556 = vpop.f32.mrb[0].mxu0
      %557 = vmatprep.mubr.bf16.mxu0 0
      %558 = vmatmul.mubr.bf16.gmra.mrb[0].mxu0 %v403
      %v559 = vpop.f32.mrb[0].mxu0
      %v560 = vadd.f32 0.0, %v559
      %v561 = vpop.f32.mrb[0].mxu0
      %v562 = vpop.f32.mrb[0].mxu0
      %v563 = vadd.f32 0.0, %v562
      %v564 = vpop.f32.mrb[0].mxu0
      %565 = vdwg.mxu0
      %v566 = vld [vmem:[%s2] sm:$0x1]
      %v568 = vlaneseq
      %v569 = vshrl.u32 %v568, 7
      %v570 = vsub.s32 0, %v569
      %v571 = vrot.slane %v566, %v570
      %v573 = vmul.f32 %v440, %v571
      %v574 = vmul.f32 %v443, %v571
      %v575 = vmul.f32 %v448, %v571
      %v576 = vmul.f32 %v451, %v571
      %v577 = vmul.f32 %v456, %v571
      %v578 = vmul.f32 %v459, %v571
      %v579 = vmul.f32 %v464, %v571
      %v580 = vmul.f32 %v467, %v571
      %v581 = vmul.f32 %v472, %v571
      %v582 = vmul.f32 %v475, %v571
      %v583 = vmul.f32 %v480, %v571
      %v584 = vmul.f32 %v483, %v571
      %v585 = vmul.f32 %v488, %v571
      %v586 = vmul.f32 %v491, %v571
      %v587 = vmul.f32 %v496, %v571
      %v588 = vmul.f32 %v499, %v571
      %v589 = vmul.f32 %v504, %v571
      %v590 = vmul.f32 %v507, %v571
      %v591 = vmul.f32 %v512, %v571
      %v592 = vmul.f32 %v515, %v571
      %v593 = vmul.f32 %v520, %v571
      %v594 = vmul.f32 %v523, %v571
      %v595 = vmul.f32 %v528, %v571
      %v596 = vmul.f32 %v531, %v571
      %v597 = vmul.f32 %v536, %v571
      %v598 = vmul.f32 %v539, %v571
      %v599 = vmul.f32 %v544, %v571
      %v600 = vmul.f32 %v547, %v571
      %v601 = vmul.f32 %v552, %v571
      %v602 = vmul.f32 %v555, %v571
      %v603 = vmul.f32 %v560, %v571
      %v604 = vmul.f32 %v563, %v571
      %v605 = vld [vmem:[%s3] sm:$0x1]
      %v607 = vlaneseq
      %v608 = vshrl.u32 %v607, 7
      %v609 = vsub.s32 0, %v608
      %v610 = vrot.slane %v605, %v609
      %v612 = vadd.f32 %v573, %v610
      %v613 = vadd.f32 %v574, %v610
      %v614 = vadd.f32 %v575, %v610
      %v615 = vadd.f32 %v576, %v610
      %v616 = vadd.f32 %v577, %v610
      %v617 = vadd.f32 %v578, %v610
      %v618 = vadd.f32 %v579, %v610
      %v619 = vadd.f32 %v580, %v610
      %v620 = vadd.f32 %v581, %v610
      %v621 = vadd.f32 %v582, %v610
      %v622 = vadd.f32 %v583, %v610
      %v623 = vadd.f32 %v584, %v610
      %v624 = vadd.f32 %v585, %v610
      %v625 = vadd.f32 %v586, %v610
      %v626 = vadd.f32 %v587, %v610
      %v627 = vadd.f32 %v588, %v610
      %v628 = vadd.f32 %v589, %v610
      %v629 = vadd.f32 %v590, %v610
      %v630 = vadd.f32 %v591, %v610
      %v631 = vadd.f32 %v592, %v610
      %v632 = vadd.f32 %v593, %v610
      %v633 = vadd.f32 %v594, %v610
      %v634 = vadd.f32 %v595, %v610
      %v635 = vadd.f32 %v596, %v610
      %v636 = vadd.f32 %v597, %v610
      %v637 = vadd.f32 %v598, %v610
      %v638 = vadd.f32 %v599, %v610
      %v639 = vadd.f32 %v600, %v610
      %v640 = vadd.f32 %v601, %v610
      %v641 = vadd.f32 %v602, %v610
      %v642 = vadd.f32 %v603, %v610
      %v643 = vadd.f32 %v604, %v610
      %v644 = vxor.u32 %v612, 2147483648
      %v645 = vxor.u32 %v613, 2147483648
      %v646 = vxor.u32 %v614, 2147483648
      %v647 = vxor.u32 %v615, 2147483648
      %v648 = vxor.u32 %v616, 2147483648
      %v649 = vxor.u32 %v617, 2147483648
      %v650 = vxor.u32 %v618, 2147483648
      %v651 = vxor.u32 %v619, 2147483648
      %v652 = vxor.u32 %v620, 2147483648
      %v653 = vxor.u32 %v621, 2147483648
      %v654 = vxor.u32 %v622, 2147483648
      %v655 = vxor.u32 %v623, 2147483648
      %v656 = vxor.u32 %v624, 2147483648
      %v657 = vxor.u32 %v625, 2147483648
      %v658 = vxor.u32 %v626, 2147483648
      %v659 = vxor.u32 %v627, 2147483648
      %v660 = vxor.u32 %v628, 2147483648
      %v661 = vxor.u32 %v629, 2147483648
      %v662 = vxor.u32 %v630, 2147483648
      %v663 = vxor.u32 %v631, 2147483648
      %v664 = vxor.u32 %v632, 2147483648
      %v665 = vxor.u32 %v633, 2147483648
      %v666 = vxor.u32 %v634, 2147483648
      %v667 = vxor.u32 %v635, 2147483648
      %v668 = vxor.u32 %v636, 2147483648
      %v669 = vxor.u32 %v637, 2147483648
      %v670 = vxor.u32 %v638, 2147483648
      %v671 = vxor.u32 %v639, 2147483648
      %v672 = vxor.u32 %v640, 2147483648
      %v673 = vxor.u32 %v641, 2147483648
      %v674 = vxor.u32 %v642, 2147483648
      %v675 = vxor.u32 %v643, 2147483648
      %v676 = vmul.f32 %v644, 1.442695
      %v677 = vpow.pop %v676
      %v678 = vmul.f32 %v645, 1.442695
      %v679 = vpow.pop %v678
      %v680 = vmul.f32 %v646, 1.442695
      %v681 = vpow.pop %v680
      %v682 = vmul.f32 %v647, 1.442695
      %v683 = vpow.pop %v682
      %v684 = vmul.f32 %v648, 1.442695
      %v685 = vpow.pop %v684
      %v686 = vmul.f32 %v649, 1.442695
      %v687 = vpow.pop %v686
      %v688 = vmul.f32 %v650, 1.442695
      %v689 = vpow.pop %v688
      %v690 = vmul.f32 %v651, 1.442695
      %v691 = vpow.pop %v690
      %v692 = vmul.f32 %v652, 1.442695
      %v693 = vpow.pop %v692
      %v694 = vmul.f32 %v653, 1.442695
      %v695 = vpow.pop %v694
      %v696 = vmul.f32 %v654, 1.442695
      %v697 = vpow.pop %v696
      %v698 = vmul.f32 %v655, 1.442695
      %v699 = vpow.pop %v698
      %v700 = vmul.f32 %v656, 1.442695
      %v701 = vpow.pop %v700
      %v702 = vmul.f32 %v657, 1.442695
      %v703 = vpow.pop %v702
      %v704 = vmul.f32 %v658, 1.442695
      %v705 = vpow.pop %v704
      %v706 = vmul.f32 %v659, 1.442695
      %v707 = vpow.pop %v706
      %v708 = vmul.f32 %v660, 1.442695
      %v709 = vpow.pop %v708
      %v710 = vmul.f32 %v661, 1.442695
      %v711 = vpow.pop %v710
      %v712 = vmul.f32 %v662, 1.442695
      %v713 = vpow.pop %v712
      %v714 = vmul.f32 %v663, 1.442695
      %v715 = vpow.pop %v714
      %v716 = vmul.f32 %v664, 1.442695
      %v717 = vpow.pop %v716
      %v718 = vmul.f32 %v665, 1.442695
      %v719 = vpow.pop %v718
      %v720 = vmul.f32 %v666, 1.442695
      %v721 = vpow.pop %v720
      %v722 = vmul.f32 %v667, 1.442695
      %v723 = vpow.pop %v722
      %v724 = vmul.f32 %v668, 1.442695
      %v725 = vpow.pop %v724
      %v726 = vmul.f32 %v669, 1.442695
      %v727 = vpow.pop %v726
      %v728 = vmul.f32 %v670, 1.442695
      %v729 = vpow.pop %v728
      %v730 = vmul.f32 %v671, 1.442695
      %v731 = vpow.pop %v730
      %v732 = vmul.f32 %v672, 1.442695
      %v733 = vpow.pop %v732
      %v734 = vmul.f32 %v673, 1.442695
      %v735 = vpow.pop %v734
      %v736 = vmul.f32 %v674, 1.442695
      %v737 = vpow.pop %v736
      %v738 = vmul.f32 %v675, 1.442695
      %v739 = vpow.pop %v738
      %v740 = vadd.f32 %v677, 1.0
      %v741 = vadd.f32 %v679, 1.0
      %v742 = vadd.f32 %v681, 1.0
      %v743 = vadd.f32 %v683, 1.0
      %v744 = vadd.f32 %v685, 1.0
      %v745 = vadd.f32 %v687, 1.0
      %v746 = vadd.f32 %v689, 1.0
      %v747 = vadd.f32 %v691, 1.0
      %v748 = vadd.f32 %v693, 1.0
      %v749 = vadd.f32 %v695, 1.0
      %v750 = vadd.f32 %v697, 1.0
      %v751 = vadd.f32 %v699, 1.0
      %v752 = vadd.f32 %v701, 1.0
      %v753 = vadd.f32 %v703, 1.0
      %v754 = vadd.f32 %v705, 1.0
      %v755 = vadd.f32 %v707, 1.0
      %v756 = vadd.f32 %v709, 1.0
      %v757 = vadd.f32 %v711, 1.0
      %v758 = vadd.f32 %v713, 1.0
      %v759 = vadd.f32 %v715, 1.0
      %v760 = vadd.f32 %v717, 1.0
      %v761 = vadd.f32 %v719, 1.0
      %v762 = vadd.f32 %v721, 1.0
      %v763 = vadd.f32 %v723, 1.0
      %v764 = vadd.f32 %v725, 1.0
      %v765 = vadd.f32 %v727, 1.0
      %v766 = vadd.f32 %v729, 1.0
      %v767 = vadd.f32 %v731, 1.0
      %v768 = vadd.f32 %v733, 1.0
      %v769 = vadd.f32 %v735, 1.0
      %v770 = vadd.f32 %v737, 1.0
      %v771 = vadd.f32 %v739, 1.0
      %v772 = vrcp.pop %v740
      %v773 = vmul.f32 1.0, %v772
      %v774 = vrcp.pop %v741
      %v775 = vmul.f32 1.0, %v774
      %v776 = vrcp.pop %v742
      %v777 = vmul.f32 1.0, %v776
      %v778 = vrcp.pop %v743
      %v779 = vmul.f32 1.0, %v778
      %v780 = vrcp.pop %v744
      %v781 = vmul.f32 1.0, %v780
      %v782 = vrcp.pop %v745
      %v783 = vmul.f32 1.0, %v782
      %v784 = vrcp.pop %v746
      %v785 = vmul.f32 1.0, %v784
      %v786 = vrcp.pop %v747
      %v787 = vmul.f32 1.0, %v786
      %v788 = vrcp.pop %v748
      %v789 = vmul.f32 1.0, %v788
      %v790 = vrcp.pop %v749
      %v791 = vmul.f32 1.0, %v790
      %v792 = vrcp.pop %v750
      %v793 = vmul.f32 1.0, %v792
      %v794 = vrcp.pop %v751
      %v795 = vmul.f32 1.0, %v794
      %v796 = vrcp.pop %v752
      %v797 = vmul.f32 1.0, %v796
      %v798 = vrcp.pop %v753
      %v799 = vmul.f32 1.0, %v798
      %v800 = vrcp.pop %v754
      %v801 = vmul.f32 1.0, %v800
      %v802 = vrcp.pop %v755
      %v803 = vmul.f32 1.0, %v802
      %v804 = vrcp.pop %v756
      %v805 = vmul.f32 1.0, %v804
      %v806 = vrcp.pop %v757
      %v807 = vmul.f32 1.0, %v806
      %v808 = vrcp.pop %v758
      %v809 = vmul.f32 1.0, %v808
      %v810 = vrcp.pop %v759
      %v811 = vmul.f32 1.0, %v810
      %v812 = vrcp.pop %v760
      %v813 = vmul.f32 1.0, %v812
      %v814 = vrcp.pop %v761
      %v815 = vmul.f32 1.0, %v814
      %v816 = vrcp.pop %v762
      %v817 = vmul.f32 1.0, %v816
      %v818 = vrcp.pop %v763
      %v819 = vmul.f32 1.0, %v818
      %v820 = vrcp.pop %v764
      %v821 = vmul.f32 1.0, %v820
      %v822 = vrcp.pop %v765
      %v823 = vmul.f32 1.0, %v822
      %v824 = vrcp.pop %v766
      %v825 = vmul.f32 1.0, %v824
      %v826 = vrcp.pop %v767
      %v827 = vmul.f32 1.0, %v826
      %v828 = vrcp.pop %v768
      %v829 = vmul.f32 1.0, %v828
      %v830 = vrcp.pop %v769
      %v831 = vmul.f32 1.0, %v830
      %v832 = vrcp.pop %v770
      %v833 = vmul.f32 1.0, %v832
      %v834 = vrcp.pop %v771
      %v835 = vmul.f32 1.0, %v834
      %v836 = vmul.f32 %v612, %v773
      %v837 = vmul.f32 %v613, %v775
      %v838 = vmul.f32 %v614, %v777
      %v839 = vmul.f32 %v615, %v779
      %v840 = vmul.f32 %v616, %v781
      %v841 = vmul.f32 %v617, %v783
      %v842 = vmul.f32 %v618, %v785
      %v843 = vmul.f32 %v619, %v787
      %v844 = vmul.f32 %v620, %v789
      %v845 = vmul.f32 %v621, %v791
      %v846 = vmul.f32 %v622, %v793
      %v847 = vmul.f32 %v623, %v795
      %v848 = vmul.f32 %v624, %v797
      %v849 = vmul.f32 %v625, %v799
      %v850 = vmul.f32 %v626, %v801
      %v851 = vmul.f32 %v627, %v803
      %v852 = vmul.f32 %v628, %v805
      %v853 = vmul.f32 %v629, %v807
      %v854 = vmul.f32 %v630, %v809
      %v855 = vmul.f32 %v631, %v811
      %v856 = vmul.f32 %v632, %v813
      %v857 = vmul.f32 %v633, %v815
      %v858 = vmul.f32 %v634, %v817
      %v859 = vmul.f32 %v635, %v819
      %v860 = vmul.f32 %v636, %v821
      %v861 = vmul.f32 %v637, %v823
      %v862 = vmul.f32 %v638, %v825
      %v863 = vmul.f32 %v639, %v827
      %v864 = vmul.f32 %v640, %v829
      %v865 = vmul.f32 %v641, %v831
      %v866 = vmul.f32 %v642, %v833
      %v867 = vmul.f32 %v643, %v835
      %v868 = vlaneseq
      %v869 = vshrl.u32 %v868, 7
      %v870 = vadd.s32 %v869, 8
      %v871 = vadd.s32 %v869, 16
      %v872 = vadd.s32 %v869, 24
      %v873 = vadd.s32 %v869, 32
      %v874 = vadd.s32 %v869, 40
      %v875 = vadd.s32 %v869, 48
      %v876 = vadd.s32 %v869, 56
      %v877 = vadd.s32 %v869, 64
      %v878 = vadd.s32 %v869, 72
      %v879 = vadd.s32 %v869, 80
      %v880 = vadd.s32 %v869, 88
      %v881 = vadd.s32 %v869, 96
      %v882 = vadd.s32 %v869, 104
      %v883 = vadd.s32 %v869, 112
      %v884 = vadd.s32 %v869, 120
      %v885 = vadd.s32 %v869, 128
      %v886 = vadd.s32 %v869, 136
      %v887 = vadd.s32 %v869, 144
      %v888 = vadd.s32 %v869, 152
      %v889 = vadd.s32 %v869, 160
      %v890 = vadd.s32 %v869, 168
      %v891 = vadd.s32 %v869, 176
      %v892 = vadd.s32 %v869, 184
      %v893 = vadd.s32 %v869, 192
      %v894 = vadd.s32 %v869, 200
      %v895 = vadd.s32 %v869, 208
      %v896 = vadd.s32 %v869, 216
      %v897 = vadd.s32 %v869, 224
      %v898 = vadd.s32 %v869, 232
      %v899 = vadd.s32 %v869, 240
      %v900 = vadd.s32 %v869, 248
      %s901 = smul.u32 %s20, 256
      %v902 = vstv %s901
      %v903 = vadd.s32 %v869, %v902
      %v904 = vadd.s32 %v870, %v902
      %v905 = vadd.s32 %v871, %v902
      %v906 = vadd.s32 %v872, %v902
      %v907 = vadd.s32 %v873, %v902
      %v908 = vadd.s32 %v874, %v902
      %v909 = vadd.s32 %v875, %v902
      %v910 = vadd.s32 %v876, %v902
      %v911 = vadd.s32 %v877, %v902
      %v912 = vadd.s32 %v878, %v902
      %v913 = vadd.s32 %v879, %v902
      %v914 = vadd.s32 %v880, %v902
      %v915 = vadd.s32 %v881, %v902
      %v916 = vadd.s32 %v882, %v902
      %v917 = vadd.s32 %v883, %v902
      %v918 = vadd.s32 %v884, %v902
      %v919 = vadd.s32 %v885, %v902
      %v920 = vadd.s32 %v886, %v902
      %v921 = vadd.s32 %v887, %v902
      %v922 = vadd.s32 %v888, %v902
      %v923 = vadd.s32 %v889, %v902
      %v924 = vadd.s32 %v890, %v902
      %v925 = vadd.s32 %v891, %v902
      %v926 = vadd.s32 %v892, %v902
      %v927 = vadd.s32 %v893, %v902
      %v928 = vadd.s32 %v894, %v902
      %v929 = vadd.s32 %v895, %v902
      %v930 = vadd.s32 %v896, %v902
      %v931 = vadd.s32 %v897, %v902
      %v932 = vadd.s32 %v898, %v902
      %v933 = vadd.s32 %v899, %v902
      %v934 = vadd.s32 %v900, %v902
      %vm935 = vcmp.lt.s32.totalorder %v903, 256
      %vm936 = vcmp.lt.s32.totalorder %v904, 256
      %vm937 = vcmp.lt.s32.totalorder %v905, 256
      %vm938 = vcmp.lt.s32.totalorder %v906, 256
      %vm939 = vcmp.lt.s32.totalorder %v907, 256
      %vm940 = vcmp.lt.s32.totalorder %v908, 256
      %vm941 = vcmp.lt.s32.totalorder %v909, 256
      %vm942 = vcmp.lt.s32.totalorder %v910, 256
      %vm943 = vcmp.lt.s32.totalorder %v911, 256
      %vm944 = vcmp.lt.s32.totalorder %v912, 256
      %vm945 = vcmp.lt.s32.totalorder %v913, 256
      %vm946 = vcmp.lt.s32.totalorder %v914, 256
      %vm947 = vcmp.lt.s32.totalorder %v915, 256
      %vm948 = vcmp.lt.s32.totalorder %v916, 256
      %vm949 = vcmp.lt.s32.totalorder %v917, 256
      %vm950 = vcmp.lt.s32.totalorder %v918, 256
      %vm951 = vcmp.lt.s32.totalorder %v919, 256
      %vm952 = vcmp.lt.s32.totalorder %v920, 256
      %vm953 = vcmp.lt.s32.totalorder %v921, 256
      %vm954 = vcmp.lt.s32.totalorder %v922, 256
      %vm955 = vcmp.lt.s32.totalorder %v923, 256
      %vm956 = vcmp.lt.s32.totalorder %v924, 256
      %vm957 = vcmp.lt.s32.totalorder %v925, 256
      %vm958 = vcmp.lt.s32.totalorder %v926, 256
      %vm959 = vcmp.lt.s32.totalorder %v927, 256
      %vm960 = vcmp.lt.s32.totalorder %v928, 256
      %vm961 = vcmp.lt.s32.totalorder %v929, 256
      %vm962 = vcmp.lt.s32.totalorder %v930, 256
      %vm963 = vcmp.lt.s32.totalorder %v931, 256
      %vm964 = vcmp.lt.s32.totalorder %v932, 256
      %vm965 = vcmp.lt.s32.totalorder %v933, 256
      %vm966 = vcmp.lt.s32.totalorder %v934, 256
      %v967 = vsel %vm935, %v836, 0.0
      %v968 = vsel %vm936, %v837, 0.0
      %v969 = vsel %vm937, %v838, 0.0
      %v970 = vsel %vm938, %v839, 0.0
      %v971 = vsel %vm939, %v840, 0.0
      %v972 = vsel %vm940, %v841, 0.0
      %v973 = vsel %vm941, %v842, 0.0
      %v974 = vsel %vm942, %v843, 0.0
      %v975 = vsel %vm943, %v844, 0.0
      %v976 = vsel %vm944, %v845, 0.0
      %v977 = vsel %vm945, %v846, 0.0
      %v978 = vsel %vm946, %v847, 0.0
      %v979 = vsel %vm947, %v848, 0.0
      %v980 = vsel %vm948, %v849, 0.0
      %v981 = vsel %vm949, %v850, 0.0
      %v982 = vsel %vm950, %v851, 0.0
      %v983 = vsel %vm951, %v852, 0.0
      %v984 = vsel %vm952, %v853, 0.0
      %v985 = vsel %vm953, %v854, 0.0
      %v986 = vsel %vm954, %v855, 0.0
      %v987 = vsel %vm955, %v856, 0.0
      %v988 = vsel %vm956, %v857, 0.0
      %v989 = vsel %vm957, %v858, 0.0
      %v990 = vsel %vm958, %v859, 0.0
      %v991 = vsel %vm959, %v860, 0.0
      %v992 = vsel %vm960, %v861, 0.0
      %v993 = vsel %vm961, %v862, 0.0
      %v994 = vsel %vm962, %v863, 0.0
      %v995 = vsel %vm963, %v864, 0.0
      %v996 = vsel %vm964, %v865, 0.0
      %v997 = vsel %vm965, %v866, 0.0
      %v998 = vsel %vm966, %v867, 0.0
      %v999 = vld [vmem:[#allocation2] sm:$0x1]
      %v1000 = vadd.f32 %v967, %v968
      %v1001 = vadd.f32 %v1000, %v969
      %v1002 = vadd.f32 %v1001, %v970
      %v1003 = vadd.f32 %v1002, %v971
      %v1004 = vadd.f32 %v1003, %v972
      %v1005 = vadd.f32 %v1004, %v973
      %v1006 = vadd.f32 %v1005, %v974
      %v1007 = vadd.f32 %v1006, %v975
      %v1008 = vadd.f32 %v1007, %v976
      %v1009 = vadd.f32 %v1008, %v977
      %v1010 = vadd.f32 %v1009, %v978
      %v1011 = vadd.f32 %v1010, %v979
      %v1012 = vadd.f32 %v1011, %v980
      %v1013 = vadd.f32 %v1012, %v981
      %v1014 = vadd.f32 %v1013, %v982
      %v1015 = vadd.f32 %v1014, %v983
      %v1016 = vadd.f32 %v1015, %v984
      %v1017 = vadd.f32 %v1016, %v985
      %v1018 = vadd.f32 %v1017, %v986
      %v1019 = vadd.f32 %v1018, %v987
      %v1020 = vadd.f32 %v1019, %v988
      %v1021 = vadd.f32 %v1020, %v989
      %v1022 = vadd.f32 %v1021, %v990
      %v1023 = vadd.f32 %v1022, %v991
      %v1024 = vadd.f32 %v1023, %v992
      %v1025 = vadd.f32 %v1024, %v993
      %v1026 = vadd.f32 %v1025, %v994
      %v1027 = vadd.f32 %v1026, %v995
      %v1028 = vadd.f32 %v1027, %v996
      %v1029 = vadd.f32 %v1028, %v997
      %v1030 = vadd.f32 %v1029, %v998
      %v1031 = vrot.slane %v1030, 4
      %v1032 = vadd.f32 %v1030, %v1031
      %v1033 = vrot.slane %v1032, 2
      %v1034 = vadd.f32 %v1032, %v1033
      %v1035 = vrot.slane %v1034, 1
      %v1036 = vadd.f32 %v1034, %v1035
      %v1037 = vadd.f32 %v999, %v1036
      %1038 = vst [vmem:[#allocation2] sm:$0x1] %v1037
      // Predicated region
      $region41: #{efficientnet_b4_transfer.2} parent=35 // pred_check
        %p1039 = pneg %p223
      $region42: #{efficientnet_b4_transfer.2} parent=35 // pred_check_branch
        %1041 = sbr.rel (%p1039) target = $region44
      $region43: #{efficientnet_b4_transfer.2} parent=35 // pred_region
        %v1042 = vld [vmem:[#allocation2] sm:$0x1]
        %v1043 = vmul.f32 %v1042, 0.00390625
        %1044 = vst [vmem:[%s221] sm:$0x1] %v1043
      $region44: #{efficientnet_b4_transfer.2} parent=35 // pred_fallthru
        _
      %p1045 = scmp.lt.s32.totalorder %s19, 1
      %s1046 = scalar_select %p1045, %s19, 1
      %s1047 = scalar_lea.vmem %s4, %s1046
      // Predicated region
      $region45: #{efficientnet_b4_transfer.2} parent=35 // pred_check
        %p1048 = pneg %p136
      $region46: #{efficientnet_b4_transfer.2} parent=35 // pred_check_branch
        %1050 = sbr.rel (%p1048) target = $region48
      $region47: #{efficientnet_b4_transfer.2} parent=35 // pred_region
        _
      $region48: #{efficientnet_b4_transfer.2} parent=35 // pred_fallthru
        _
    $region36: #{efficientnet_b4_transfer.2} parent=5 // pred_fallthru
      _
    %p1051 = scmp.le.s32.totalorder 2, %s10
    // Predicated region
    $region49: #{efficientnet_b4_transfer.2} parent=5 // pred_check
      %p1052 = pneg %p1051
    $region50: #{efficientnet_b4_transfer.2} parent=5 // pred_check_branch
      %1054 = sbr.rel (%p1052) target = $region52
    $region51: #{efficientnet_b4_transfer.2} parent=5 // pred_region
      %s1055 = ssub.s32 %s10, 2
      // Predicated region
      $region53: #{efficientnet_b4_transfer.2} parent=51 // pred_check
        %p1056 = pneg %p142
      $region54: #{efficientnet_b4_transfer.2} parent=51 // pred_check_branch
        %1058 = sbr.rel (%p1056) target = $region56
      $region55: #{efficientnet_b4_transfer.2} parent=51 // pred_region
        %p1059 = scmp.lt.s32.totalorder %s21, 1
        %s1060 = scalar_select %p1059, %s21, 1
        %s1061 = scalar_lea.vmem %s4, %s1060
      $region56: #{efficientnet_b4_transfer.2} parent=51 // pred_fallthru
        _
    $region52: #{efficientnet_b4_transfer.2} parent=5 // pred_fallthru
      _
  $region6: #{efficientnet_b4_transfer.2} parent=0 // loop_footer
    %s14 = sadd.s32 1, %s10
  $region7: #{efficientnet_b4_transfer.2} parent=0 // loop_footer_branch
    %9 = sbr.rel target = $region3
  $region8: #{efficientnet_b4_transfer.2} parent=0 // loop_exit
    _

// kernel: efficientnet_b4_transfer.3
$region0: #{efficientnet_b4_transfer.3}
  #allocation0 [shape = 'u32[]', space=smem, size = 0x4, offset = 0x4, fixed_abs, tag = 'smem constant byte address 0x4 - core index']
  #allocation1 [shape = 'u32[144,128]{1,0:T(1,128)}', space=vmem, size = 0x12000, scoped, tag = 'internal scratch']
  %s0 = inlined_call_operand.vmem [shape: f32[2,128], index: 0, kind: input, shape index: {}]
  %s1 = inlined_call_operand.vmem [shape: bf16[128,1024], index: 1, kind: input, shape index: {}]
  %s2 = inlined_call_operand.vmem [shape: f32[1,1024], index: 2, kind: input, shape index: {}]
  %s3 = inlined_call_operand.vmem [shape: bf16[1024,256], index: 3, kind: input, shape index: {}]
  %s4 = inlined_call_operand.vmem [shape: f32[1,256], index: 4, kind: input, shape index: {}]
  %s5 = inlined_call_operand.vmem [shape: bf16[256,128], index: 5, kind: input, shape index: {}]
  %s6 = inlined_call_operand.vmem [shape: f32[1,128], index: 6, kind: input, shape index: {}]
  %s7 = inlined_call_operand.hbm [shape: f32[2,128], index: 7, kind: output, shape index: {}]
  %s8 = sld [smem:[#allocation0]]
  $region38: #{efficientnet_b4_transfer.3} parent=0
    _
  %s10 = ssub.s32 1, %s8
  %s11 = scalar_select 0, %s10, %s8
  $region1: #{efficientnet_b4_transfer.3} parent=0
    #allocation2 [shape = 'u8[1024]{0}', space=vmem, size = 0x400, scoped, tag = 'output window, operand 0, single buffered']
    #allocation3 [shape = 's32[1]{0}', space=sflag, size = 0x4, scoped, tag = 'scoped memory for efficientnet_b4_transfer.3']
    %12 = vsyncpa [#allocation3], 0
    // Predicated region
    $region2: #{efficientnet_b4_transfer.3} parent=1 // pred_check
      _
    $region3: #{efficientnet_b4_transfer.3} parent=1 // pred_check_branch
      %14 = sbr.rel (0) target = $region5
    $region4: #{efficientnet_b4_transfer.3} parent=1 // pred_region
      _
    $region5: #{efficientnet_b4_transfer.3} parent=1 // pred_fallthru
      _
    // Predicated region
    $region6: #{efficientnet_b4_transfer.3} parent=1 // pred_check
      _
    $region7: #{efficientnet_b4_transfer.3} parent=1 // pred_check_branch
      %16 = sbr.rel (0) target = $region9
    $region8: #{efficientnet_b4_transfer.3} parent=1 // pred_region
      _
    $region9: #{efficientnet_b4_transfer.3} parent=1 // pred_fallthru
      _
    // Predicated region
    $region10: #{efficientnet_b4_transfer.3} parent=1 // pred_check
      _
    $region11: #{efficientnet_b4_transfer.3} parent=1 // pred_check_branch
      %18 = sbr.rel (0) target = $region13
    $region12: #{efficientnet_b4_transfer.3} parent=1 // pred_region
      _
    $region13: #{efficientnet_b4_transfer.3} parent=1 // pred_fallthru
      _
    // Predicated region
    $region14: #{efficientnet_b4_transfer.3} parent=1 // pred_check
      _
    $region15: #{efficientnet_b4_transfer.3} parent=1 // pred_check_branch
      %20 = sbr.rel (0) target = $region17
    $region16: #{efficientnet_b4_transfer.3} parent=1 // pred_region
      _
    $region17: #{efficientnet_b4_transfer.3} parent=1 // pred_fallthru
      _
    // Predicated region
    $region18: #{efficientnet_b4_transfer.3} parent=1 // pred_check
      _
    $region19: #{efficientnet_b4_transfer.3} parent=1 // pred_check_branch
      %22 = sbr.rel (0) target = $region21
    $region20: #{efficientnet_b4_transfer.3} parent=1 // pred_region
      _
    $region21: #{efficientnet_b4_transfer.3} parent=1 // pred_fallthru
      _
    // Predicated region
    $region22: #{efficientnet_b4_transfer.3} parent=1 // pred_check
      _
    $region23: #{efficientnet_b4_transfer.3} parent=1 // pred_check_branch
      %24 = sbr.rel (0) target = $region25
    $region24: #{efficientnet_b4_transfer.3} parent=1 // pred_region
      _
    $region25: #{efficientnet_b4_transfer.3} parent=1 // pred_fallthru
      _
    // Predicated region
    $region26: #{efficientnet_b4_transfer.3} parent=1 // pred_check
      _
    $region27: #{efficientnet_b4_transfer.3} parent=1 // pred_check_branch
      %26 = sbr.rel (0) target = $region29
    $region28: #{efficientnet_b4_transfer.3} parent=1 // pred_region
      _
    $region29: #{efficientnet_b4_transfer.3} parent=1 // pred_fallthru
      _
    %v28 = vld [vmem:[%s0] sm:$0x3]
    %v29 = vpack.c.bf16 %v28, %v28
    %v30 = vld [vmem:[%s1] sm:$0xff]
    %v31 = vld [vmem:[%s1 + $0x8] sm:$0xff]
    %v32 = vld [vmem:[%s1 + $0x10] sm:$0xff]
    %v33 = vld [vmem:[%s1 + $0x18] sm:$0xff]
    %v34 = vld [vmem:[%s1 + $0x20] sm:$0xff]
    %v35 = vld [vmem:[%s1 + $0x28] sm:$0xff]
    %v36 = vld [vmem:[%s1 + $0x30] sm:$0xff]
    %v37 = vld [vmem:[%s1 + $0x38] sm:$0xff]
    %v38 = vld [vmem:[%s1 + $0x40] sm:$0xff]
    %v39 = vld [vmem:[%s1 + $0x48] sm:$0xff]
    %v40 = vld [vmem:[%s1 + $0x50] sm:$0xff]
    %v41 = vld [vmem:[%s1 + $0x58] sm:$0xff]
    %v42 = vld [vmem:[%s1 + $0x60] sm:$0xff]
    %v43 = vld [vmem:[%s1 + $0x68] sm:$0xff]
    %v44 = vld [vmem:[%s1 + $0x70] sm:$0xff]
    %v45 = vld [vmem:[%s1 + $0x78] sm:$0xff]
    %v46 = vld [vmem:[%s1 + $0x80] sm:$0xff]
    %v47 = vld [vmem:[%s1 + $0x88] sm:$0xff]
    %v48 = vld [vmem:[%s1 + $0x90] sm:$0xff]
    %v49 = vld [vmem:[%s1 + $0x98] sm:$0xff]
    %v50 = vld [vmem:[%s1 + $0xa0] sm:$0xff]
    %v51 = vld [vmem:[%s1 + $0xa8] sm:$0xff]
    %v52 = vld [vmem:[%s1 + $0xb0] sm:$0xff]
    %v53 = vld [vmem:[%s1 + $0xb8] sm:$0xff]
    %v54 = vld [vmem:[%s1 + $0xc0] sm:$0xff]
    %v55 = vld [vmem:[%s1 + $0xc8] sm:$0xff]
    %v56 = vld [vmem:[%s1 + $0xd0] sm:$0xff]
    %v57 = vld [vmem:[%s1 + $0xd8] sm:$0xff]
    %v58 = vld [vmem:[%s1 + $0xe0] sm:$0xff]
    %v59 = vld [vmem:[%s1 + $0xe8] sm:$0xff]
    %v60 = vld [vmem:[%s1 + $0xf0] sm:$0xff]
    %v61 = vld [vmem:[%s1 + $0xf8] sm:$0xff]
    %v62 = vld [vmem:[%s1 + $0x100] sm:$0xff]
    %v63 = vld [vmem:[%s1 + $0x108] sm:$0xff]
    %v64 = vld [vmem:[%s1 + $0x110] sm:$0xff]
    %v65 = vld [vmem:[%s1 + $0x118] sm:$0xff]
    %v66 = vld [vmem:[%s1 + $0x120] sm:$0xff]
    %v67 = vld [vmem:[%s1 + $0x128] sm:$0xff]
    %v68 = vld [vmem:[%s1 + $0x130] sm:$0xff]
    %v69 = vld [vmem:[%s1 + $0x138] sm:$0xff]
    %v70 = vld [vmem:[%s1 + $0x140] sm:$0xff]
    %v71 = vld [vmem:[%s1 + $0x148] sm:$0xff]
    %v72 = vld [vmem:[%s1 + $0x150] sm:$0xff]
    %v73 = vld [vmem:[%s1 + $0x158] sm:$0xff]
    %v74 = vld [vmem:[%s1 + $0x160] sm:$0xff]
    %v75 = vld [vmem:[%s1 + $0x168] sm:$0xff]
    %v76 = vld [vmem:[%s1 + $0x170] sm:$0xff]
    %v77 = vld [vmem:[%s1 + $0x178] sm:$0xff]
    %v78 = vld [vmem:[%s1 + $0x180] sm:$0xff]
    %v79 = vld [vmem:[%s1 + $0x188] sm:$0xff]
    %v80 = vld [vmem:[%s1 + $0x190] sm:$0xff]
    %v81 = vld [vmem:[%s1 + $0x198] sm:$0xff]
    %v82 = vld [vmem:[%s1 + $0x1a0] sm:$0xff]
    %v83 = vld [vmem:[%s1 + $0x1a8] sm:$0xff]
    %v84 = vld [vmem:[%s1 + $0x1b0] sm:$0xff]
    %v85 = vld [vmem:[%s1 + $0x1b8] sm:$0xff]
    %v86 = vld [vmem:[%s1 + $0x1c0] sm:$0xff]
    %v87 = vld [vmem:[%s1 + $0x1c8] sm:$0xff]
    %v88 = vld [vmem:[%s1 + $0x1d0] sm:$0xff]
    %v89 = vld [vmem:[%s1 + $0x1d8] sm:$0xff]
    %v90 = vld [vmem:[%s1 + $0x1e0] sm:$0xff]
    %v91 = vld [vmem:[%s1 + $0x1e8] sm:$0xff]
    %v92 = vld [vmem:[%s1 + $0x1f0] sm:$0xff]
    %v93 = vld [vmem:[%s1 + $0x1f8] sm:$0xff]
    %v94 = vld [vmem:[%s2] sm:$0xff]
    %v96 = vlaneseq
    %v97 = vshrl.u32 %v96, 7
    %v98 = vsub.s32 0, %v97
    %v99 = vrot.slane %v94, %v98
    %v100 = vlaneseq
    %v101 = vshrl.u32 %v100, 7
    %v102 = vsub.s32 1, %v101
    %v103 = vrot.slane %v94, %v102
    %v104 = vlaneseq
    %v105 = vshrl.u32 %v104, 7
    %v106 = vsub.s32 2, %v105
    %v107 = vrot.slane %v94, %v106
    %v108 = vlaneseq
    %v109 = vshrl.u32 %v108, 7
    %v110 = vsub.s32 3, %v109
    %v111 = vrot.slane %v94, %v110
    %v112 = vlaneseq
    %v113 = vshrl.u32 %v112, 7
    %v114 = vsub.s32 4, %v113
    %v115 = vrot.slane %v94, %v114
    %v116 = vlaneseq
    %v117 = vshrl.u32 %v116, 7
    %v118 = vsub.s32 5, %v117
    %v119 = vrot.slane %v94, %v118
    %v120 = vlaneseq
    %v121 = vshrl.u32 %v120, 7
    %v122 = vsub.s32 6, %v121
    %v123 = vrot.slane %v94, %v122
    %v124 = vlaneseq
    %v125 = vshrl.u32 %v124, 7
    %v126 = vsub.s32 7, %v125
    %v127 = vrot.slane %v94, %v126
    %v200 = vunpack.c.l.b16 %v30
    %v201 = vunpack.c.h.b16 %v30
    %v202 = vunpack.c.l.b16 %v31
    %v203 = vunpack.c.h.b16 %v31
    %v204 = vunpack.c.l.b16 %v32
    %v205 = vunpack.c.h.b16 %v32
    %v206 = vunpack.c.l.b16 %v33
    %v207 = vunpack.c.h.b16 %v33
    %v208 = vunpack.c.l.b16 %v34
    %v209 = vunpack.c.h.b16 %v34
    %v210 = vunpack.c.l.b16 %v35
    %v211 = vunpack.c.h.b16 %v35
    %v212 = vunpack.c.l.b16 %v36
    %v213 = vunpack.c.h.b16 %v36
    %v214 = vunpack.c.l.b16 %v37
    %v215 = vunpack.c.h.b16 %v37
    %v216 = vunpack.c.l.b16 %v38
    %v217 = vunpack.c.h.b16 %v38
    %v218 = vunpack.c.l.b16 %v39
    %v219 = vunpack.c.h.b16 %v39
    %v220 = vunpack.c.l.b16 %v40
    %v221 = vunpack.c.h.b16 %v40
    %v222 = vunpack.c.l.b16 %v41
    %v223 = vunpack.c.h.b16 %v41
    %v224 = vunpack.c.l.b16 %v42
    %v225 = vunpack.c.h.b16 %v42
    %v226 = vunpack.c.l.b16 %v43
    %v227 = vunpack.c.h.b16 %v43
    %v228 = vunpack.c.l.b16 %v44
    %v229 = vunpack.c.h.b16 %v44
    %v230 = vunpack.c.l.b16 %v45
    %v231 = vunpack.c.h.b16 %v45
    %v232 = vunpack.c.l.b16 %v46
    %v233 = vunpack.c.h.b16 %v46
    %v234 = vunpack.c.l.b16 %v47
    %v235 = vunpack.c.h.b16 %v47
    %v236 = vunpack.c.l.b16 %v48
    %v237 = vunpack.c.h.b16 %v48
    %v238 = vunpack.c.l.b16 %v49
    %v239 = vunpack.c.h.b16 %v49
    %v240 = vunpack.c.l.b16 %v50
    %v241 = vunpack.c.h.b16 %v50
    %v242 = vunpack.c.l.b16 %v51
    %v243 = vunpack.c.h.b16 %v51
    %v244 = vunpack.c.l.b16 %v52
    %v245 = vunpack.c.h.b16 %v52
    %v246 = vunpack.c.l.b16 %v53
    %v247 = vunpack.c.h.b16 %v53
    %v248 = vunpack.c.l.b16 %v54
    %v249 = vunpack.c.h.b16 %v54
    %v250 = vunpack.c.l.b16 %v55
    %v251 = vunpack.c.h.b16 %v55
    %v252 = vunpack.c.l.b16 %v56
    %v253 = vunpack.c.h.b16 %v56
    %v254 = vunpack.c.l.b16 %v57
    %v255 = vunpack.c.h.b16 %v57
    %v256 = vunpack.c.l.b16 %v58
    %v257 = vunpack.c.h.b16 %v58
    %v258 = vunpack.c.l.b16 %v59
    %v259 = vunpack.c.h.b16 %v59
    %v260 = vunpack.c.l.b16 %v60
    %v261 = vunpack.c.h.b16 %v60
    %v262 = vunpack.c.l.b16 %v61
    %v263 = vunpack.c.h.b16 %v61
    %v264 = vunpack.c.l.b16 %v62
    %v265 = vunpack.c.h.b16 %v62
    %v266 = vunpack.c.l.b16 %v63
    %v267 = vunpack.c.h.b16 %v63
    %v268 = vunpack.c.l.b16 %v64
    %v269 = vunpack.c.h.b16 %v64
    %v270 = vunpack.c.l.b16 %v65
    %v271 = vunpack.c.h.b16 %v65
    %v272 = vunpack.c.l.b16 %v66
    %v273 = vunpack.c.h.b16 %v66
    %v274 = vunpack.c.l.b16 %v67
    %v275 = vunpack.c.h.b16 %v67
    %v276 = vunpack.c.l.b16 %v68
    %v277 = vunpack.c.h.b16 %v68
    %v278 = vunpack.c.l.b16 %v69
    %v279 = vunpack.c.h.b16 %v69
    %v280 = vunpack.c.l.b16 %v70
    %v281 = vunpack.c.h.b16 %v70
    %v282 = vunpack.c.l.b16 %v71
    %v283 = vunpack.c.h.b16 %v71
    %v284 = vunpack.c.l.b16 %v72
    %v285 = vunpack.c.h.b16 %v72
    %v286 = vunpack.c.l.b16 %v73
    %v287 = vunpack.c.h.b16 %v73
    %v288 = vunpack.c.l.b16 %v74
    %v289 = vunpack.c.h.b16 %v74
    %v290 = vunpack.c.l.b16 %v75
    %v291 = vunpack.c.h.b16 %v75
    %v292 = vunpack.c.l.b16 %v76
    %v293 = vunpack.c.h.b16 %v76
    %v294 = vunpack.c.l.b16 %v77
    %v295 = vunpack.c.h.b16 %v77
    %v296 = vunpack.c.l.b16 %v78
    %v297 = vunpack.c.h.b16 %v78
    %v298 = vunpack.c.l.b16 %v79
    %v299 = vunpack.c.h.b16 %v79
    %v300 = vunpack.c.l.b16 %v80
    %v301 = vunpack.c.h.b16 %v80
    %v302 = vunpack.c.l.b16 %v81
    %v303 = vunpack.c.h.b16 %v81
    %v304 = vunpack.c.l.b16 %v82
    %v305 = vunpack.c.h.b16 %v82
    %v306 = vunpack.c.l.b16 %v83
    %v307 = vunpack.c.h.b16 %v83
    %v308 = vunpack.c.l.b16 %v84
    %v309 = vunpack.c.h.b16 %v84
    %v310 = vunpack.c.l.b16 %v85
    %v311 = vunpack.c.h.b16 %v85
    %v312 = vunpack.c.l.b16 %v86
    %v313 = vunpack.c.h.b16 %v86
    %v314 = vunpack.c.l.b16 %v87
    %v315 = vunpack.c.h.b16 %v87
    %v316 = vunpack.c.l.b16 %v88
    %v317 = vunpack.c.h.b16 %v88
    %v318 = vunpack.c.l.b16 %v89
    %v319 = vunpack.c.h.b16 %v89
    %v320 = vunpack.c.l.b16 %v90
    %v321 = vunpack.c.h.b16 %v90
    %v322 = vunpack.c.l.b16 %v91
    %v323 = vunpack.c.h.b16 %v91
    %v324 = vunpack.c.l.b16 %v92
    %v325 = vunpack.c.h.b16 %v92
    %v326 = vunpack.c.l.b16 %v93
    %v327 = vunpack.c.h.b16 %v93
    %v328 = vpack.c.b16 %v208, %v200
    %v329 = vpack.c.b16 %v209, %v201
    %v330 = vpack.c.b16 %v210, %v202
    %v331 = vpack.c.b16 %v211, %v203
    %v332 = vpack.c.b16 %v212, %v204
    %v333 = vpack.c.b16 %v213, %v205
    %v334 = vpack.c.b16 %v214, %v206
    %v335 = vpack.c.b16 %v215, %v207
    %v336 = vpack.c.b16 %v224, %v216
    %v337 = vpack.c.b16 %v225, %v217
    %v338 = vpack.c.b16 %v226, %v218
    %v339 = vpack.c.b16 %v227, %v219
    %v340 = vpack.c.b16 %v228, %v220
    %v341 = vpack.c.b16 %v229, %v221
    %v342 = vpack.c.b16 %v230, %v222
    %v343 = vpack.c.b16 %v231, %v223
    %v344 = vpack.c.b16 %v240, %v232
    %v345 = vpack.c.b16 %v241, %v233
    %v346 = vpack.c.b16 %v242, %v234
    %v347 = vpack.c.b16 %v243, %v235
    %v348 = vpack.c.b16 %v244, %v236
    %v349 = vpack.c.b16 %v245, %v237
    %v350 = vpack.c.b16 %v246, %v238
    %v351 = vpack.c.b16 %v247, %v239
    %v352 = vpack.c.b16 %v256, %v248
    %v353 = vpack.c.b16 %v257, %v249
    %v354 = vpack.c.b16 %v258, %v250
    %v355 = vpack.c.b16 %v259, %v251
    %v356 = vpack.c.b16 %v260, %v252
    %v357 = vpack.c.b16 %v261, %v253
    %v358 = vpack.c.b16 %v262, %v254
    %v359 = vpack.c.b16 %v263, %v255
    %v360 = vpack.c.b16 %v272, %v264
    %v361 = vpack.c.b16 %v273, %v265
    %v362 = vpack.c.b16 %v274, %v266
    %v363 = vpack.c.b16 %v275, %v267
    %v364 = vpack.c.b16 %v276, %v268
    %v365 = vpack.c.b16 %v277, %v269
    %v366 = vpack.c.b16 %v278, %v270
    %v367 = vpack.c.b16 %v279, %v271
    %v368 = vpack.c.b16 %v288, %v280
    %v369 = vpack.c.b16 %v289, %v281
    %v370 = vpack.c.b16 %v290, %v282
    %v371 = vpack.c.b16 %v291, %v283
    %v372 = vpack.c.b16 %v292, %v284
    %v373 = vpack.c.b16 %v293, %v285
    %v374 = vpack.c.b16 %v294, %v286
    %v375 = vpack.c.b16 %v295, %v287
    %v376 = vpack.c.b16 %v304, %v296
    %v377 = vpack.c.b16 %v305, %v297
    %v378 = vpack.c.b16 %v306, %v298
    %v379 = vpack.c.b16 %v307, %v299
    %v380 = vpack.c.b16 %v308, %v300
    %v381 = vpack.c.b16 %v309, %v301
    %v382 = vpack.c.b16 %v310, %v302
    %v383 = vpack.c.b16 %v311, %v303
    %v384 = vpack.c.b16 %v320, %v312
    %v385 = vpack.c.b16 %v321, %v313
    %v386 = vpack.c.b16 %v322, %v314
    %v387 = vpack.c.b16 %v323, %v315
    %v388 = vpack.c.b16 %v324, %v316
    %v389 = vpack.c.b16 %v325, %v317
    %v390 = vpack.c.b16 %v326, %v318
    %v391 = vpack.c.b16 %v327, %v319
    %456 = vmatprep.subr.bf16.mxu0 %v329
    %457 = vmatpush1.bf16.msra.mxu0 %v328
    %458 = vmatprep.subr.bf16.mxu0 %v337
    %459 = vmatpush1.bf16.msra.mxu0 %v336
    %460 = vmatprep.subr.bf16.mxu0 %v345
    %461 = vmatpush1.bf16.msra.mxu0 %v344
    %462 = vmatprep.subr.bf16.mxu0 %v353
    %463 = vmatpush1.bf16.msra.mxu0 %v352
    %464 = vmatprep.subr.bf16.mxu0 %v361
    %465 = vmatpush1.bf16.msra.mxu0 %v360
    %466 = vmatprep.subr.bf16.mxu0 %v369
    %467 = vmatpush1.bf16.msra.mxu0 %v368
    %468 = vmatprep.subr.bf16.mxu0 %v377
    %469 = vmatpush1.bf16.msra.mxu0 %v376
    %470 = vmatprep.subr.bf16.mxu0 %v385
    %471 = vmatpush1.bf16.msra.mxu0 %v384
    %472 = vmatprep.subr.bf16.mxu0 0
    %473 = vmatpush1.bf16.msra.mxu0 0
    %474 = vmatprep.subr.bf16.mxu0 0
    %475 = vmatpush1.bf16.msra.mxu0 0
    %476 = vmatprep.subr.bf16.mxu0 0
    %477 = vmatpush1.bf16.msra.mxu0 0
    %478 = vmatprep.subr.bf16.mxu0 0
    %479 = vmatpush1.bf16.msra.mxu0 0
    %480 = vmatprep.subr.bf16.mxu0 0
    %481 = vmatpush1.bf16.msra.mxu0 0
    %482 = vmatprep.subr.bf16.mxu0 0
    %483 = vmatpush1.bf16.msra.mxu0 0
    %484 = vmatprep.subr.bf16.mxu0 0
    %485 = vmatpush1.bf16.msra.mxu0 0
    %486 = vmatprep.subr.bf16.mxu0 0
    %487 = vmatpush1.bf16.msra.mxu0 0
    %488 = vmatprep.mubr.bf16.mxu0 0
    %489 = vmatmul.mubr.bf16.gmra.mrb[0].mxu0 %v29
    %v490 = vpop.f32.mrb[0].mxu0
    %v491 = vadd.f32 %v99, %v490
    %v492 = vpop.f32.mrb[0].mxu0
    %v493 = vadd.f32 %v103, %v492
    %v494 = vpop.f32.mrb[0].mxu0
    %v495 = vpop.f32.mrb[0].mxu0
    %496 = vdwg.mxu0
    %497 = vmatprep.subr.bf16.mxu0 %v331
    %498 = vmatpush1.bf16.msra.mxu0 %v330
    %499 = vmatprep.subr.bf16.mxu0 %v339
    %500 = vmatpush1.bf16.msra.mxu0 %v338
    %501 = vmatprep.subr.bf16.mxu0 %v347
    %502 = vmatpush1.bf16.msra.mxu0 %v346
    %503 = vmatprep.subr.bf16.mxu0 %v355
    %504 = vmatpush1.bf16.msra.mxu0 %v354
    %505 = vmatprep.subr.bf16.mxu0 %v363
    %506 = vmatpush1.bf16.msra.mxu0 %v362
    %507 = vmatprep.subr.bf16.mxu0 %v371
    %508 = vmatpush1.bf16.msra.mxu0 %v370
    %509 = vmatprep.subr.bf16.mxu0 %v379
    %510 = vmatpush1.bf16.msra.mxu0 %v378
    %511 = vmatprep.subr.bf16.mxu0 %v387
    %512 = vmatpush1.bf16.msra.mxu0 %v386
    %513 = vmatprep.subr.bf16.mxu0 0
    %514 = vmatpush1.bf16.msra.mxu0 0
    %515 = vmatprep.subr.bf16.mxu0 0
    %516 = vmatpush1.bf16.msra.mxu0 0
    %517 = vmatprep.subr.bf16.mxu0 0
    %518 = vmatpush1.bf16.msra.mxu0 0
    %519 = vmatprep.subr.bf16.mxu0 0
    %520 = vmatpush1.bf16.msra.mxu0 0
    %521 = vmatprep.subr.bf16.mxu0 0
    %522 = vmatpush1.bf16.msra.mxu0 0
    %523 = vmatprep.subr.bf16.mxu0 0
    %524 = vmatpush1.bf16.msra.mxu0 0
    %525 = vmatprep.subr.bf16.mxu0 0
    %526 = vmatpush1.bf16.msra.mxu0 0
    %527 = vmatprep.subr.bf16.mxu0 0
    %528 = vmatpush1.bf16.msra.mxu0 0
    %529 = vmatprep.mubr.bf16.mxu0 0
    %530 = vmatmul.mubr.bf16.gmra.mrb[0].mxu0 %v29
    %v531 = vpop.f32.mrb[0].mxu0
    %v532 = vadd.f32 %v107, %v531
    %v533 = vpop.f32.mrb[0].mxu0
    %v534 = vadd.f32 %v111, %v533
    %v535 = vpop.f32.mrb[0].mxu0
    %v536 = vpop.f32.mrb[0].mxu0
    %537 = vdwg.mxu0
    %538 = vmatprep.subr.bf16.mxu0 %v333
    %539 = vmatpush1.bf16.msra.mxu0 %v332
    %540 = vmatprep.subr.bf16.mxu0 %v341
    %541 = vmatpush1.bf16.msra.mxu0 %v340
    %542 = vmatprep.subr.bf16.mxu0 %v349
    %543 = vmatpush1.bf16.msra.mxu0 %v348
    %544 = vmatprep.subr.bf16.mxu0 %v357
    %545 = vmatpush1.bf16.msra.mxu0 %v356
    %546 = vmatprep.subr.bf16.mxu0 %v365
    %547 = vmatpush1.bf16.msra.mxu0 %v364
    %548 = vmatprep.subr.bf16.mxu0 %v373
    %549 = vmatpush1.bf16.msra.mxu0 %v372
    %550 = vmatprep.subr.bf16.mxu0 %v381
    %551 = vmatpush1.bf16.msra.mxu0 %v380
    %552 = vmatprep.subr.bf16.mxu0 %v389
    %553 = vmatpush1.bf16.msra.mxu0 %v388
    %554 = vmatprep.subr.bf16.mxu0 0
    %555 = vmatpush1.bf16.msra.mxu0 0
    %556 = vmatprep.subr.bf16.mxu0 0
    %557 = vmatpush1.bf16.msra.mxu0 0
    %558 = vmatprep.subr.bf16.mxu0 0
    %559 = vmatpush1.bf16.msra.mxu0 0
    %560 = vmatprep.subr.bf16.mxu0 0
    %561 = vmatpush1.bf16.msra.mxu0 0
    %562 = vmatprep.subr.bf16.mxu0 0
    %563 = vmatpush1.bf16.msra.mxu0 0
    %564 = vmatprep.subr.bf16.mxu0 0
    %565 = vmatpush1.bf16.msra.mxu0 0
    %566 = vmatprep.subr.bf16.mxu0 0
    %567 = vmatpush1.bf16.msra.mxu0 0
    %568 = vmatprep.subr.bf16.mxu0 0
    %569 = vmatpush1.bf16.msra.mxu0 0
    %570 = vmatprep.mubr.bf16.mxu0 0
    %571 = vmatmul.mubr.bf16.gmra.mrb[0].mxu0 %v29
    %v572 = vpop.f32.mrb[0].mxu0
    %v573 = vadd.f32 %v115, %v572
    %v574 = vpop.f32.mrb[0].mxu0
    %v575 = vadd.f32 %v119, %v574
    %v576 = vpop.f32.mrb[0].mxu0
    %v577 = vpop.f32.mrb[0].mxu0
    %578 = vdwg.mxu0
    %579 = vmatprep.subr.bf16.mxu0 %v335
    %580 = vmatpush1.bf16.msra.mxu0 %v334
    %581 = vmatprep.subr.bf16.mxu0 %v343
    %582 = vmatpush1.bf16.msra.mxu0 %v342
    %583 = vmatprep.subr.bf16.mxu0 %v351
    %584 = vmatpush1.bf16.msra.mxu0 %v350
    %585 = vmatprep.subr.bf16.mxu0 %v359
    %586 = vmatpush1.bf16.msra.mxu0 %v358
    %587 = vmatprep.subr.bf16.mxu0 %v367
    %588 = vmatpush1.bf16.msra.mxu0 %v366
    %589 = vmatprep.subr.bf16.mxu0 %v375
    %590 = vmatpush1.bf16.msra.mxu0 %v374
    %591 = vmatprep.subr.bf16.mxu0 %v383
    %592 = vmatpush1.bf16.msra.mxu0 %v382
    %593 = vmatprep.subr.bf16.mxu0 %v391
    %594 = vmatpush1.bf16.msra.mxu0 %v390
    %595 = vmatprep.subr.bf16.mxu0 0
    %596 = vmatpush1.bf16.msra.mxu0 0
    %597 = vmatprep.subr.bf16.mxu0 0
    %598 = vmatpush1.bf16.msra.mxu0 0
    %599 = vmatprep.subr.bf16.mxu0 0
    %600 = vmatpush1.bf16.msra.mxu0 0
    %601 = vmatprep.subr.bf16.mxu0 0
    %602 = vmatpush1.bf16.msra.mxu0 0
    %603 = vmatprep.subr.bf16.mxu0 0
    %604 = vmatpush1.bf16.msra.mxu0 0
    %605 = vmatprep.subr.bf16.mxu0 0
    %606 = vmatpush1.bf16.msra.mxu0 0
    %607 = vmatprep.subr.bf16.mxu0 0
    %608 = vmatpush1.bf16.msra.mxu0 0
    %609 = vmatprep.subr.bf16.mxu0 0
    %610 = vmatpush1.bf16.msra.mxu0 0
    %611 = vmatprep.mubr.bf16.mxu0 0
    %612 = vmatmul.mubr.bf16.gmra.mrb[0].mxu0 %v29
    %v613 = vpop.f32.mrb[0].mxu0
    %v614 = vadd.f32 %v123, %v613
    %v615 = vpop.f32.mrb[0].mxu0
    %v616 = vadd.f32 %v127, %v615
    %v617 = vpop.f32.mrb[0].mxu0
    %v618 = vpop.f32.mrb[0].mxu0
    %619 = vdwg.mxu0
    %v620 = vpack.c.bf16 %v491, %v491
    %v621 = vpack.c.bf16 %v493, %v493
    %v622 = vpack.c.bf16 %v532, %v532
    %v623 = vpack.c.bf16 %v534, %v534
    %v624 = vpack.c.bf16 %v573, %v573
    %v625 = vpack.c.bf16 %v575, %v575
    %v626 = vpack.c.bf16 %v614, %v614
    %v627 = vpack.c.bf16 %v616, %v616
    %v628 = vld [vmem:[%s3] sm:$0xff]
    %v629 = vld [vmem:[%s3 + $0x8] sm:$0xff]
    %v630 = vld [vmem:[%s3 + $0x10] sm:$0xff]
    %v631 = vld [vmem:[%s3 + $0x18] sm:$0xff]
    %v632 = vld [vmem:[%s3 + $0x20] sm:$0xff]
    %v633 = vld [vmem:[%s3 + $0x28] sm:$0xff]
    %v634 = vld [vmem:[%s3 + $0x30] sm:$0xff]
    %v635 = vld [vmem:[%s3 + $0x38] sm:$0xff]
    %v636 = vld [vmem:[%s3 + $0x40] sm:$0xff]
    %v637 = vld [vmem:[%s3 + $0x48] sm:$0xff]
    %v638 = vld [vmem:[%s3 + $0x50] sm:$0xff]
    %v639 = vld [vmem:[%s3 + $0x58] sm:$0xff]
    %v640 = vld [vmem:[%s3 + $0x60] sm:$0xff]
    %v641 = vld [vmem:[%s3 + $0x68] sm:$0xff]
    %v642 = vld [vmem:[%s3 + $0x70] sm:$0xff]
    %v643 = vld [vmem:[%s3 + $0x78] sm:$0xff]
    %v644 = vld [vmem:[%s3 + $0x80] sm:$0xff]
    %v645 = vld [vmem:[%s3 + $0x88] sm:$0xff]
    %v646 = vld [vmem:[%s3 + $0x90] sm:$0xff]
    %v647 = vld [vmem:[%s3 + $0x98] sm:$0xff]
    %v648 = vld [vmem:[%s3 + $0xa0] sm:$0xff]
    %v649 = vld [vmem:[%s3 + $0xa8] sm:$0xff]
    %v650 = vld [vmem:[%s3 + $0xb0] sm:$0xff]
    %v651 = vld [vmem:[%s3 + $0xb8] sm:$0xff]
    %v652 = vld [vmem:[%s3 + $0xc0] sm:$0xff]
    %v653 = vld [vmem:[%s3 + $0xc8] sm:$0xff]
    %v654 = vld [vmem:[%s3 + $0xd0] sm:$0xff]
    %v655 = vld [vmem:[%s3 + $0xd8] sm:$0xff]
    %v656 = vld [vmem:[%s3 + $0xe0] sm:$0xff]
    %v657 = vld [vmem:[%s3 + $0xe8] sm:$0xff]
    %v658 = vld [vmem:[%s3 + $0xf0] sm:$0xff]
    %v659 = vld [vmem:[%s3 + $0xf8] sm:$0xff]
    %v660 = vld [vmem:[%s3 + $0x100] sm:$0xff]
    %v661 = vld [vmem:[%s3 + $0x108] sm:$0xff]
    %v662 = vld [vmem:[%s3 + $0x110] sm:$0xff]
    %v663 = vld [vmem:[%s3 + $0x118] sm:$0xff]
    %v664 = vld [vmem:[%s3 + $0x120] sm:$0xff]
    %v665 = vld [vmem:[%s3 + $0x128] sm:$0xff]
    %v666 = vld [vmem:[%s3 + $0x130] sm:$0xff]
    %v667 = vld [vmem:[%s3 + $0x138] sm:$0xff]
    %v668 = vld [vmem:[%s3 + $0x140] sm:$0xff]
    %v669 = vld [vmem:[%s3 + $0x148] sm:$0xff]
    %v670 = vld [vmem:[%s3 + $0x150] sm:$0xff]
    %v671 = vld [vmem:[%s3 + $0x158] sm:$0xff]
    %v672 = vld [vmem:[%s3 + $0x160] sm:$0xff]
    %v673 = vld [vmem:[%s3 + $0x168] sm:$0xff]
    %v674 = vld [vmem:[%s3 + $0x170] sm:$0xff]
    %v675 = vld [vmem:[%s3 + $0x178] sm:$0xff]
    %v676 = vld [vmem:[%s3 + $0x180] sm:$0xff]
    %v677 = vld [vmem:[%s3 + $0x188] sm:$0xff]
    %v678 = vld [vmem:[%s3 + $0x190] sm:$0xff]
    %v679 = vld [vmem:[%s3 + $0x198] sm:$0xff]
    %v680 = vld [vmem:[%s3 + $0x1a0] sm:$0xff]
    %v681 = vld [vmem:[%s3 + $0x1a8] sm:$0xff]
    %v682 = vld [vmem:[%s3 + $0x1b0] sm:$0xff]
    %v683 = vld [vmem:[%s3 + $0x1b8] sm:$0xff]
    %v684 = vld [vmem:[%s3 + $0x1c0] sm:$0xff]
    %v685 = vld [vmem:[%s3 + $0x1c8] sm:$0xff]
    %v686 = vld [vmem:[%s3 + $0x1d0] sm:$0xff]
    %v687 = vld [vmem:[%s3 + $0x1d8] sm:$0xff]
    %v688 = vld [vmem:[%s3 + $0x1e0] sm:$0xff]
    %v689 = vld [vmem:[%s3 + $0x1e8] sm:$0xff]
    %v690 = vld [vmem:[%s3 + $0x1f0] sm:$0xff]
    %v691 = vld [vmem:[%s3 + $0x1f8] sm:$0xff]
    %v692 = vld [vmem:[%s3 + $0x200] sm:$0xff]
    %v693 = vld [vmem:[%s3 + $0x208] sm:$0xff]
    %v694 = vld [vmem:[%s3 + $0x210] sm:$0xff]
    %v695 = vld [vmem:[%s3 + $0x218] sm:$0xff]
    %v696 = vld [vmem:[%s3 + $0x220] sm:$0xff]
    %v697 = vld [vmem:[%s3 + $0x228] sm:$0xff]
    %v698 = vld [vmem:[%s3 + $0x230] sm:$0xff]
    %v699 = vld [vmem:[%s3 + $0x238] sm:$0xff]
    %v700 = vld [vmem:[%s3 + $0x240] sm:$0xff]
    %v701 = vld [vmem:[%s3 + $0x248] sm:$0xff]
    %v702 = vld [vmem:[%s3 + $0x250] sm:$0xff]
    %v703 = vld [vmem:[%s3 + $0x258] sm:$0xff]
    %v704 = vld [vmem:[%s3 + $0x260] sm:$0xff]
    %v705 = vld [vmem:[%s3 + $0x268] sm:$0xff]
    %v706 = vld [vmem:[%s3 + $0x270] sm:$0xff]
    %v707 = vld [vmem:[%s3 + $0x278] sm:$0xff]
    %v708 = vld [vmem:[%s3 + $0x280] sm:$0xff]
    %v709 = vld [vmem:[%s3 + $0x288] sm:$0xff]
    %v710 = vld [vmem:[%s3 + $0x290] sm:$0xff]
    %v711 = vld [vmem:[%s3 + $0x298] sm:$0xff]
    %v712 = vld [vmem:[%s3 + $0x2a0] sm:$0xff]
    %v713 = vld [vmem:[%s3 + $0x2a8] sm:$0xff]
    %v714 = vld [vmem:[%s3 + $0x2b0] sm:$0xff]
    %v715 = vld [vmem:[%s3 + $0x2b8] sm:$0xff]
    %v716 = vld [vmem:[%s3 + $0x2c0] sm:$0xff]
    %v717 = vld [vmem:[%s3 + $0x2c8] sm:$0xff]
    %v718 = vld [vmem:[%s3 + $0x2d0] sm:$0xff]
    %v719 = vld [vmem:[%s3 + $0x2d8] sm:$0xff]
    %v720 = vld [vmem:[%s3 + $0x2e0] sm:$0xff]
    %v721 = vld [vmem:[%s3 + $0x2e8] sm:$0xff]
    %v722 = vld [vmem:[%s3 + $0x2f0] sm:$0xff]
    %v723 = vld [vmem:[%s3 + $0x2f8] sm:$0xff]
    %v724 = vld [vmem:[%s3 + $0x300] sm:$0xff]
    %v725 = vld [vmem:[%s3 + $0x308] sm:$0xff]
    %v726 = vld [vmem:[%s3 + $0x310] sm:$0xff]
    %v727 = vld [vmem:[%s3 + $0x318] sm:$0xff]
    %v728 = vld [vmem:[%s3 + $0x320] sm:$0xff]
    %v729 = vld [vmem:[%s3 + $0x328] sm:$0xff]
    %v730 = vld [vmem:[%s3 + $0x330] sm:$0xff]
    %v731 = vld [vmem:[%s3 + $0x338] sm:$0xff]
    %v732 = vld [vmem:[%s3 + $0x340] sm:$0xff]
    %v733 = vld [vmem:[%s3 + $0x348] sm:$0xff]
    %v734 = vld [vmem:[%s3 + $0x350] sm:$0xff]
    %v735 = vld [vmem:[%s3 + $0x358] sm:$0xff]
    %v736 = vld [vmem:[%s3 + $0x360] sm:$0xff]
    %v737 = vld [vmem:[%s3 + $0x368] sm:$0xff]
    %v738 = vld [vmem:[%s3 + $0x370] sm:$0xff]
    %v739 = vld [vmem:[%s3 + $0x378] sm:$0xff]
    %v740 = vld [vmem:[%s3 + $0x380] sm:$0xff]
    %v741 = vld [vmem:[%s3 + $0x388] sm:$0xff]
    %v742 = vld [vmem:[%s3 + $0x390] sm:$0xff]
    %v743 = vld [vmem:[%s3 + $0x398] sm:$0xff]
    %v744 = vld [vmem:[%s3 + $0x3a0] sm:$0xff]
    %v745 = vld [vmem:[%s3 + $0x3a8] sm:$0xff]
    %v746 = vld [vmem:[%s3 + $0x3b0] sm:$0xff]
    %v747 = vld [vmem:[%s3 + $0x3b8] sm:$0xff]
    %v748 = vld [vmem:[%s3 + $0x3c0] sm:$0xff]
    %v749 = vld [vmem:[%s3 + $0x3c8] sm:$0xff]
    %v750 = vld [vmem:[%s3 + $0x3d0] sm:$0xff]
    %v751 = vld [vmem:[%s3 + $0x3d8] sm:$0xff]
    %v752 = vld [vmem:[%s3 + $0x3e0] sm:$0xff]
    %v753 = vld [vmem:[%s3 + $0x3e8] sm:$0xff]
    %v754 = vld [vmem:[%s3 + $0x3f0] sm:$0xff]
    %v755 = vld [vmem:[%s3 + $0x3f8] sm:$0xff]
    %v756 = vld [vmem:[%s4] sm:$0x3]
    %v758 = vlaneseq
    %v759 = vshrl.u32 %v758, 7
    %v760 = vsub.s32 0, %v759
    %v761 = vrot.slane %v756, %v760
    %v762 = vlaneseq
    %v763 = vshrl.u32 %v762, 7
    %v764 = vsub.s32 1, %v763
    %v765 = vrot.slane %v756, %v764
    %v896 = vunpack.c.l.b16 %v628
    %v897 = vunpack.c.h.b16 %v628
    %v898 = vunpack.c.l.b16 %v629
    %v899 = vunpack.c.h.b16 %v629
    %v900 = vunpack.c.l.b16 %v630
    %v901 = vunpack.c.h.b16 %v630
    %v902 = vunpack.c.l.b16 %v631
    %v903 = vunpack.c.h.b16 %v631
    %v904 = vunpack.c.l.b16 %v632
    %v905 = vunpack.c.h.b16 %v632
    %v906 = vunpack.c.l.b16 %v633
    %v907 = vunpack.c.h.b16 %v633
    %v908 = vunpack.c.l.b16 %v634
    %v909 = vunpack.c.h.b16 %v634
    %v910 = vunpack.c.l.b16 %v635
    %v911 = vunpack.c.h.b16 %v635
    %v912 = vunpack.c.l.b16 %v636
    %v913 = vunpack.c.h.b16 %v636
    %v914 = vunpack.c.l.b16 %v637
    %v915 = vunpack.c.h.b16 %v637
    %v916 = vunpack.c.l.b16 %v638
    %v917 = vunpack.c.h.b16 %v638
    %v918 = vunpack.c.l.b16 %v639
    %v919 = vunpack.c.h.b16 %v639
    %v920 = vunpack.c.l.b16 %v640
    %v921 = vunpack.c.h.b16 %v640
    %v922 = vunpack.c.l.b16 %v641
    %v923 = vunpack.c.h.b16 %v641
    %v924 = vunpack.c.l.b16 %v642
    %v925 = vunpack.c.h.b16 %v642
    %v926 = vunpack.c.l.b16 %v643
    %v927 = vunpack.c.h.b16 %v643
    %v928 = vunpack.c.l.b16 %v644
    %v929 = vunpack.c.h.b16 %v644
    %v930 = vunpack.c.l.b16 %v645
    %v931 = vunpack.c.h.b16 %v645
    %v932 = vunpack.c.l.b16 %v646
    %v933 = vunpack.c.h.b16 %v646
    %v934 = vunpack.c.l.b16 %v647
    %v935 = vunpack.c.h.b16 %v647
    %v936 = vunpack.c.l.b16 %v648
    %v937 = vunpack.c.h.b16 %v648
    %v938 = vunpack.c.l.b16 %v649
    %v939 = vunpack.c.h.b16 %v649
    %v940 = vunpack.c.l.b16 %v650
    %v941 = vunpack.c.h.b16 %v650
    %v942 = vunpack.c.l.b16 %v651
    %v943 = vunpack.c.h.b16 %v651
    %v944 = vunpack.c.l.b16 %v652
    %v945 = vunpack.c.h.b16 %v652
    %v946 = vunpack.c.l.b16 %v653
    %v947 = vunpack.c.h.b16 %v653
    %v948 = vunpack.c.l.b16 %v654
    %v949 = vunpack.c.h.b16 %v654
    %v950 = vunpack.c.l.b16 %v655
    %v951 = vunpack.c.h.b16 %v655
    %v952 = vunpack.c.l.b16 %v656
    %v953 = vunpack.c.h.b16 %v656
    %v954 = vunpack.c.l.b16 %v657
    %v955 = vunpack.c.h.b16 %v657
    %v956 = vunpack.c.l.b16 %v658
    %v957 = vunpack.c.h.b16 %v658
    %v958 = vunpack.c.l.b16 %v659
    %v959 = vunpack.c.h.b16 %v659
    %v960 = vunpack.c.l.b16 %v660
    %v961 = vunpack.c.h.b16 %v660
    %v962 = vunpack.c.l.b16 %v661
    %v963 = vunpack.c.h.b16 %v661
    %v964 = vunpack.c.l.b16 %v662
    %v965 = vunpack.c.h.b16 %v662
    %v966 = vunpack.c.l.b16 %v663
    %v967 = vunpack.c.h.b16 %v663
    %v968 = vunpack.c.l.b16 %v664
    %v969 = vunpack.c.h.b16 %v664
    %v970 = vunpack.c.l.b16 %v665
    %v971 = vunpack.c.h.b16 %v665
    %v972 = vunpack.c.l.b16 %v666
    %v973 = vunpack.c.h.b16 %v666
    %v974 = vunpack.c.l.b16 %v667
    %v975 = vunpack.c.h.b16 %v667
    %v976 = vunpack.c.l.b16 %v668
    %v977 = vunpack.c.h.b16 %v668
    %v978 = vunpack.c.l.b16 %v669
    %v979 = vunpack.c.h.b16 %v669
    %v980 = vunpack.c.l.b16 %v670
    %v981 = vunpack.c.h.b16 %v670
    %v982 = vunpack.c.l.b16 %v671
    %v983 = vunpack.c.h.b16 %v671
    %v984 = vunpack.c.l.b16 %v672
    %v985 = vunpack.c.h.b16 %v672
    %v986 = vunpack.c.l.b16 %v673
    %v987 = vunpack.c.h.b16 %v673
    %v988 = vunpack.c.l.b16 %v674
    %v989 = vunpack.c.h.b16 %v674
    %v990 = vunpack.c.l.b16 %v675
    %v991 = vunpack.c.h.b16 %v675
    %v992 = vunpack.c.l.b16 %v676
    %v993 = vunpack.c.h.b16 %v676
    %v994 = vunpack.c.l.b16 %v677
    %v995 = vunpack.c.h.b16 %v677
    %v996 = vunpack.c.l.b16 %v678
    %v997 = vunpack.c.h.b16 %v678
    %v998 = vunpack.c.l.b16 %v679
    %v999 = vunpack.c.h.b16 %v679
    %v1000 = vunpack.c.l.b16 %v680
    %v1001 = vunpack.c.h.b16 %v680
    %v1002 = vunpack.c.l.b16 %v681
    %v1003 = vunpack.c.h.b16 %v681
    %v1004 = vunpack.c.l.b16 %v682
    %v1005 = vunpack.c.h.b16 %v682
    %v1006 = vunpack.c.l.b16 %v683
    %v1007 = vunpack.c.h.b16 %v683
    %v1008 = vunpack.c.l.b16 %v684
    %v1009 = vunpack.c.h.b16 %v684
    %v1010 = vunpack.c.l.b16 %v685
    %v1011 = vunpack.c.h.b16 %v685
    %v1012 = vunpack.c.l.b16 %v686
    %v1013 = vunpack.c.h.b16 %v686
    %v1014 = vunpack.c.l.b16 %v687
    %v1015 = vunpack.c.h.b16 %v687
    %v1016 = vunpack.c.l.b16 %v688
    %v1017 = vunpack.c.h.b16 %v688
    %v1018 = vunpack.c.l.b16 %v689
    %v1019 = vunpack.c.h.b16 %v689
    %v1020 = vunpack.c.l.b16 %v690
    %v1021 = vunpack.c.h.b16 %v690
    %v1022 = vunpack.c.l.b16 %v691
    %v1023 = vunpack.c.h.b16 %v691
    %v1024 = vunpack.c.l.b16 %v692
    %v1025 = vunpack.c.h.b16 %v692
    %v1026 = vunpack.c.l.b16 %v693
    %v1027 = vunpack.c.h.b16 %v693
    %v1028 = vunpack.c.l.b16 %v694
    %v1029 = vunpack.c.h.b16 %v694
    %v1030 = vunpack.c.l.b16 %v695
    %v1031 = vunpack.c.h.b16 %v695
    %v1032 = vunpack.c.l.b16 %v696
    %v1033 = vunpack.c.h.b16 %v696
    %v1034 = vunpack.c.l.b16 %v697
    %v1035 = vunpack.c.h.b16 %v697
    %v1036 = vunpack.c.l.b16 %v698
    %v1037 = vunpack.c.h.b16 %v698
    %v1038 = vunpack.c.l.b16 %v699
    %v1039 = vunpack.c.h.b16 %v699
    %v1040 = vunpack.c.l.b16 %v700
    %v1041 = vunpack.c.h.b16 %v700
    %v1042 = vunpack.c.l.b16 %v701
    %v1043 = vunpack.c.h.b16 %v701
    %v1044 = vunpack.c.l.b16 %v702
    %v1045 = vunpack.c.h.b16 %v702
    %v1046 = vunpack.c.l.b16 %v703
    %v1047 = vunpack.c.h.b16 %v703
    %v1048 = vunpack.c.l.b16 %v704
    %v1049 = vunpack.c.h.b16 %v704
    %v1050 = vunpack.c.l.b16 %v705
    %v1051 = vunpack.c.h.b16 %v705
    %v1052 = vunpack.c.l.b16 %v706
    %v1053 = vunpack.c.h.b16 %v706
    %v1054 = vunpack.c.l.b16 %v707
    %v1055 = vunpack.c.h.b16 %v707
    %v1056 = vunpack.c.l.b16 %v708
    %v1057 = vunpack.c.h.b16 %v708
    %v1058 = vunpack.c.l.b16 %v709
    %v1059 = vunpack.c.h.b16 %v709
    %v1060 = vunpack.c.l.b16 %v710
    %v1061 = vunpack.c.h.b16 %v710
    %v1062 = vunpack.c.l.b16 %v711
    %v1063 = vunpack.c.h.b16 %v711
    %v1064 = vunpack.c.l.b16 %v712
    %v1065 = vunpack.c.h.b16 %v712
    %v1066 = vunpack.c.l.b16 %v713
    %v1067 = vunpack.c.h.b16 %v713
    %v1068 = vunpack.c.l.b16 %v714
    %v1069 = vunpack.c.h.b16 %v714
    %v1070 = vunpack.c.l.b16 %v715
    %v1071 = vunpack.c.h.b16 %v715
    %v1072 = vunpack.c.l.b16 %v716
    %v1073 = vunpack.c.h.b16 %v716
    %v1074 = vunpack.c.l.b16 %v717
    %v1075 = vunpack.c.h.b16 %v717
    %v1076 = vunpack.c.l.b16 %v718
    %v1077 = vunpack.c.h.b16 %v718
    %v1078 = vunpack.c.l.b16 %v719
    %v1079 = vunpack.c.h.b16 %v719
    %v1080 = vunpack.c.l.b16 %v720
    %v1081 = vunpack.c.h.b16 %v720
    %v1082 = vunpack.c.l.b16 %v721
    %v1083 = vunpack.c.h.b16 %v721
    %v1084 = vunpack.c.l.b16 %v722
    %v1085 = vunpack.c.h.b16 %v722
    %v1086 = vunpack.c.l.b16 %v723
    %v1087 = vunpack.c.h.b16 %v723
    %v1088 = vunpack.c.l.b16 %v724
    %v1089 = vunpack.c.h.b16 %v724
    %v1090 = vunpack.c.l.b16 %v725
    %v1091 = vunpack.c.h.b16 %v725
    %v1092 = vunpack.c.l.b16 %v726
    %v1093 = vunpack.c.h.b16 %v726
    %v1094 = vunpack.c.l.b16 %v727
    %v1095 = vunpack.c.h.b16 %v727
    %v1096 = vunpack.c.l.b16 %v728
    %v1097 = vunpack.c.h.b16 %v728
    %v1098 = vunpack.c.l.b16 %v729
    %v1099 = vunpack.c.h.b16 %v729
    %v1100 = vunpack.c.l.b16 %v730
    %v1101 = vunpack.c.h.b16 %v730
    %v1102 = vunpack.c.l.b16 %v731
    %v1103 = vunpack.c.h.b16 %v731
    %v1104 = vunpack.c.l.b16 %v732
    %v1105 = vunpack.c.h.b16 %v732
    %v1106 = vunpack.c.l.b16 %v733
    %v1107 = vunpack.c.h.b16 %v733
    %v1108 = vunpack.c.l.b16 %v734
    %v1109 = vunpack.c.h.b16 %v734
    %v1110 = vunpack.c.l.b16 %v735
    %v1111 = vunpack.c.h.b16 %v735
    %v1112 = vunpack.c.l.b16 %v736
    %v1113 = vunpack.c.h.b16 %v736
    %v1114 = vunpack.c.l.b16 %v737
    %v1115 = vunpack.c.h.b16 %v737
    %v1116 = vunpack.c.l.b16 %v738
    %v1117 = vunpack.c.h.b16 %v738
    %v1118 = vunpack.c.l.b16 %v739
    %v1119 = vunpack.c.h.b16 %v739
    %v1120 = vunpack.c.l.b16 %v740
    %v1121 = vunpack.c.h.b16 %v740
    %v1122 = vunpack.c.l.b16 %v741
    %v1123 = vunpack.c.h.b16 %v741
    %v1124 = vunpack.c.l.b16 %v742
    %v1125 = vunpack.c.h.b16 %v742
    %v1126 = vunpack.c.l.b16 %v743
    %v1127 = vunpack.c.h.b16 %v743
    %v1128 = vunpack.c.l.b16 %v744
    %v1129 = vunpack.c.h.b16 %v744
    %v1130 = vunpack.c.l.b16 %v745
    %v1131 = vunpack.c.h.b16 %v745
    %v1132 = vunpack.c.l.b16 %v746
    %v1133 = vunpack.c.h.b16 %v746
    %v1134 = vunpack.c.l.b16 %v747
    %v1135 = vunpack.c.h.b16 %v747
    %v1136 = vunpack.c.l.b16 %v748
    %v1137 = vunpack.c.h.b16 %v748
    %v1138 = vunpack.c.l.b16 %v749
    %v1139 = vunpack.c.h.b16 %v749
    %v1140 = vunpack.c.l.b16 %v750
    %v1141 = vunpack.c.h.b16 %v750
    %v1142 = vunpack.c.l.b16 %v751
    %v1143 = vunpack.c.h.b16 %v751
    %v1144 = vunpack.c.l.b16 %v752
    %v1145 = vunpack.c.h.b16 %v752
    %v1146 = vunpack.c.l.b16 %v753
    %v1147 = vunpack.c.h.b16 %v753
    %v1148 = vunpack.c.l.b16 %v754
    %v1149 = vunpack.c.h.b16 %v754
    %v1150 = vunpack.c.l.b16 %v755
    %v1151 = vunpack.c.h.b16 %v755
    %v1152 = vpack.c.b16 %v898, %v896
    %v1153 = vpack.c.b16 %v899, %v897
    %v1154 = vpack.c.b16 %v902, %v900
    %v1155 = vpack.c.b16 %v903, %v901
    %v1156 = vpack.c.b16 %v906, %v904
    %v1157 = vpack.c.b16 %v907, %v905
    %v1158 = vpack.c.b16 %v910, %v908
    %v1159 = vpack.c.b16 %v911, %v909
    %v1160 = vpack.c.b16 %v914, %v912
    %v1161 = vpack.c.b16 %v915, %v913
    %v1162 = vpack.c.b16 %v918, %v916
    %v1163 = vpack.c.b16 %v919, %v917
    %v1164 = vpack.c.b16 %v922, %v920
    %v1165 = vpack.c.b16 %v923, %v921
    %v1166 = vpack.c.b16 %v926, %v924
    %v1167 = vpack.c.b16 %v927, %v925
    %v1168 = vpack.c.b16 %v930, %v928
    %v1169 = vpack.c.b16 %v931, %v929
    %v1170 = vpack.c.b16 %v934, %v932
    %v1171 = vpack.c.b16 %v935, %v933
    %v1172 = vpack.c.b16 %v938, %v936
    %v1173 = vpack.c.b16 %v939, %v937
    %v1174 = vpack.c.b16 %v942, %v940
    %v1175 = vpack.c.b16 %v943, %v941
    %v1176 = vpack.c.b16 %v946, %v944
    %v1177 = vpack.c.b16 %v947, %v945
    %v1178 = vpack.c.b16 %v950, %v948
    %v1179 = vpack.c.b16 %v951, %v949
    %v1180 = vpack.c.b16 %v954, %v952
    %v1181 = vpack.c.b16 %v955, %v953
    %v1182 = vpack.c.b16 %v958, %v956
    %v1183 = vpack.c.b16 %v959, %v957
    %v1184 = vpack.c.b16 %v962, %v960
    %v1185 = vpack.c.b16 %v963, %v961
    %v1186 = vpack.c.b16 %v966, %v964
    %v1187 = vpack.c.b16 %v967, %v965
    %v1188 = vpack.c.b16 %v970, %v968
    %v1189 = vpack.c.b16 %v971, %v969
    %v1190 = vpack.c.b16 %v974, %v972
    %v1191 = vpack.c.b16 %v975, %v973
    %v1192 = vpack.c.b16 %v978, %v976
    %v1193 = vpack.c.b16 %v979, %v977
    %v1194 = vpack.c.b16 %v982, %v980
    %v1195 = vpack.c.b16 %v983, %v981
    %v1196 = vpack.c.b16 %v986, %v984
    %v1197 = vpack.c.b16 %v987, %v985
    %v1198 = vpack.c.b16 %v990, %v988
    %v1199 = vpack.c.b16 %v991, %v989
    %v1200 = vpack.c.b16 %v994, %v992
    %v1201 = vpack.c.b16 %v995, %v993
    %v1202 = vpack.c.b16 %v998, %v996
    %v1203 = vpack.c.b16 %v999, %v997
    %v1204 = vpack.c.b16 %v1002, %v1000
    %v1205 = vpack.c.b16 %v1003, %v1001
    %v1206 = vpack.c.b16 %v1006, %v1004
    %v1207 = vpack.c.b16 %v1007, %v1005
    %v1208 = vpack.c.b16 %v1010, %v1008
    %v1209 = vpack.c.b16 %v1011, %v1009
    %v1210 = vpack.c.b16 %v1014, %v1012
    %v1211 = vpack.c.b16 %v1015, %v1013
    %v1212 = vpack.c.b16 %v1018, %v1016
    %v1213 = vpack.c.b16 %v1019, %v1017
    %v1214 = vpack.c.b16 %v1022, %v1020
    %v1215 = vpack.c.b16 %v1023, %v1021
    %v1216 = vpack.c.b16 %v1026, %v1024
    %v1217 = vpack.c.b16 %v1027, %v1025
    %v1218 = vpack.c.b16 %v1030, %v1028
    %v1219 = vpack.c.b16 %v1031, %v1029
    %v1220 = vpack.c.b16 %v1034, %v1032
    %v1221 = vpack.c.b16 %v1035, %v1033
    %v1222 = vpack.c.b16 %v1038, %v1036
    %v1223 = vpack.c.b16 %v1039, %v1037
    %v1224 = vpack.c.b16 %v1042, %v1040
    %v1225 = vpack.c.b16 %v1043, %v1041
    %v1226 = vpack.c.b16 %v1046, %v1044
    %v1227 = vpack.c.b16 %v1047, %v1045
    %v1228 = vpack.c.b16 %v1050, %v1048
    %v1229 = vpack.c.b16 %v1051, %v1049
    %v1230 = vpack.c.b16 %v1054, %v1052
    %v1231 = vpack.c.b16 %v1055, %v1053
    %v1232 = vpack.c.b16 %v1058, %v1056
    %v1233 = vpack.c.b16 %v1059, %v1057
    %v1234 = vpack.c.b16 %v1062, %v1060
    %v1235 = vpack.c.b16 %v1063, %v1061
    %v1236 = vpack.c.b16 %v1066, %v1064
    %v1237 = vpack.c.b16 %v1067, %v1065
    %v1238 = vpack.c.b16 %v1070, %v1068
    %v1239 = vpack.c.b16 %v1071, %v1069
    %v1240 = vpack.c.b16 %v1074, %v1072
    %v1241 = vpack.c.b16 %v1075, %v1073
    %v1242 = vpack.c.b16 %v1078, %v1076
    %v1243 = vpack.c.b16 %v1079, %v1077
    %v1244 = vpack.c.b16 %v1082, %v1080
    %v1245 = vpack.c.b16 %v1083, %v1081
    %v1246 = vpack.c.b16 %v1086, %v1084
    %v1247 = vpack.c.b16 %v1087, %v1085
    %v1248 = vpack.c.b16 %v1090, %v1088
    %v1249 = vpack.c.b16 %v1091, %v1089
    %v1250 = vpack.c.b16 %v1094, %v1092
    %v1251 = vpack.c.b16 %v1095, %v1093
    %v1252 = vpack.c.b16 %v1098, %v1096
    %v1253 = vpack.c.b16 %v1099, %v1097
    %v1254 = vpack.c.b16 %v1102, %v1100
    %v1255 = vpack.c.b16 %v1103, %v1101
    %v1256 = vpack.c.b16 %v1106, %v1104
    %v1257 = vpack.c.b16 %v1107, %v1105
    %v1258 = vpack.c.b16 %v1110, %v1108
    %v1259 = vpack.c.b16 %v1111, %v1109
    %v1260 = vpack.c.b16 %v1114, %v1112
    %v1261 = vpack.c.b16 %v1115, %v1113
    %v1262 = vpack.c.b16 %v1118, %v1116
    %v1263 = vpack.c.b16 %v1119, %v1117
    %v1264 = vpack.c.b16 %v1122, %v1120
    %v1265 = vpack.c.b16 %v1123, %v1121
    %v1266 = vpack.c.b16 %v1126, %v1124
    %v1267 = vpack.c.b16 %v1127, %v1125
    %v1268 = vpack.c.b16 %v1130, %v1128
    %v1269 = vpack.c.b16 %v1131, %v1129
    %v1270 = vpack.c.b16 %v1134, %v1132
    %v1271 = vpack.c.b16 %v1135, %v1133
    %v1272 = vpack.c.b16 %v1138, %v1136
    %v1273 = vpack.c.b16 %v1139, %v1137
    %v1274 = vpack.c.b16 %v1142, %v1140
    %v1275 = vpack.c.b16 %v1143, %v1141
    %v1276 = vpack.c.b16 %v1146, %v1144
    %v1277 = vpack.c.b16 %v1147, %v1145
    %v1278 = vpack.c.b16 %v1150, %v1148
    %v1279 = vpack.c.b16 %v1151, %v1149
    %1408 = vmatprep.subr.bf16.mxu0 %v1153
    %1409 = vmatpush1.bf16.msra.mxu0 %v1152
    %1410 = vmatprep.subr.bf16.mxu0 %v1155
    %1411 = vmatpush1.bf16.msra.mxu0 %v1154
    %1412 = vmatprep.subr.bf16.mxu0 %v1157
    %1413 = vmatpush1.bf16.msra.mxu0 %v1156
    %1414 = vmatprep.subr.bf16.mxu0 %v1159
    %1415 = vmatpush1.bf16.msra.mxu0 %v1158
    %1416 = vmatprep.subr.bf16.mxu0 %v1161
    %1417 = vmatpush1.bf16.msra.mxu0 %v1160
    %1418 = vmatprep.subr.bf16.mxu0 %v1163
    %1419 = vmatpush1.bf16.msra.mxu0 %v1162
    %1420 = vmatprep.subr.bf16.mxu0 %v1165
    %1421 = vmatpush1.bf16.msra.mxu0 %v1164
    %1422 = vmatprep.subr.bf16.mxu0 %v1167
    %1423 = vmatpush1.bf16.msra.mxu0 %v1166
    %1424 = vmatprep.subr.bf16.mxu0 %v1169
    %1425 = vmatpush1.bf16.msra.mxu0 %v1168
    %1426 = vmatprep.subr.bf16.mxu0 %v1171
    %1427 = vmatpush1.bf16.msra.mxu0 %v1170
    %1428 = vmatprep.subr.bf16.mxu0 %v1173
    %1429 = vmatpush1.bf16.msra.mxu0 %v1172
    %1430 = vmatprep.subr.bf16.mxu0 %v1175
    %1431 = vmatpush1.bf16.msra.mxu0 %v1174
    %1432 = vmatprep.subr.bf16.mxu0 %v1177
    %1433 = vmatpush1.bf16.msra.mxu0 %v1176
    %1434 = vmatprep.subr.bf16.mxu0 %v1179
    %1435 = vmatpush1.bf16.msra.mxu0 %v1178
    %1436 = vmatprep.subr.bf16.mxu0 %v1181
    %1437 = vmatpush1.bf16.msra.mxu0 %v1180
    %1438 = vmatprep.subr.bf16.mxu0 %v1183
    %1439 = vmatpush1.bf16.msra.mxu0 %v1182
    %1440 = vmatprep.mubr.bf16.mxu0 %v621
    %1441 = vmatmul.mubr.bf16.gmra.mrb[0].mxu0 %v620
    %v1442 = vpop.f32.mrb[0].mxu0
    %v1443 = vadd.f32 %v761, %v1442
    %v1444 = vpop.f32.mrb[0].mxu0
    %v1445 = vadd.f32 %v765, %v1444
    %v1446 = vpop.f32.mrb[0].mxu0
    %v1447 = vpop.f32.mrb[0].mxu0
    %1448 = vdwg.mxu0
    %1449 = vmatprep.subr.bf16.mxu0 %v1185
    %1450 = vmatpush1.bf16.msra.mxu0 %v1184
    %1451 = vmatprep.subr.bf16.mxu0 %v1187
    %1452 = vmatpush1.bf16.msra.mxu0 %v1186
    %1453 = vmatprep.subr.bf16.mxu0 %v1189
    %1454 = vmatpush1.bf16.msra.mxu0 %v1188
    %1455 = vmatprep.subr.bf16.mxu0 %v1191
    %1456 = vmatpush1.bf16.msra.mxu0 %v1190
    %1457 = vmatprep.subr.bf16.mxu0 %v1193
    %1458 = vmatpush1.bf16.msra.mxu0 %v1192
    %1459 = vmatprep.subr.bf16.mxu0 %v1195
    %1460 = vmatpush1.bf16.msra.mxu0 %v1194
    %1461 = vmatprep.subr.bf16.mxu0 %v1197
    %1462 = vmatpush1.bf16.msra.mxu0 %v1196
    %1463 = vmatprep.subr.bf16.mxu0 %v1199
    %1464 = vmatpush1.bf16.msra.mxu0 %v1198
    %1465 = vmatprep.subr.bf16.mxu0 %v1201
    %1466 = vmatpush1.bf16.msra.mxu0 %v1200
    %1467 = vmatprep.subr.bf16.mxu0 %v1203
    %1468 = vmatpush1.bf16.msra.mxu0 %v1202
    %1469 = vmatprep.subr.bf16.mxu0 %v1205
    %1470 = vmatpush1.bf16.msra.mxu0 %v1204
    %1471 = vmatprep.subr.bf16.mxu0 %v1207
    %1472 = vmatpush1.bf16.msra.mxu0 %v1206
    %1473 = vmatprep.subr.bf16.mxu0 %v1209
    %1474 = vmatpush1.bf16.msra.mxu0 %v1208
    %1475 = vmatprep.subr.bf16.mxu0 %v1211
    %1476 = vmatpush1.bf16.msra.mxu0 %v1210
    %1477 = vmatprep.subr.bf16.mxu0 %v1213
    %1478 = vmatpush1.bf16.msra.mxu0 %v1212
    %1479 = vmatprep.subr.bf16.mxu0 %v1215
    %1480 = vmatpush1.bf16.msra.mxu0 %v1214
    %1481 = vmatprep.mubr.bf16.mxu0 %v623
    %1482 = vmatmul.mubr.bf16.gmra.mrb[0].mxu0 %v622
    %v1483 = vpop.f32.mrb[0].mxu0
    %v1484 = vadd.f32 %v1443, %v1483
    %v1485 = vpop.f32.mrb[0].mxu0
    %v1486 = vadd.f32 %v1445, %v1485
    %v1487 = vpop.f32.mrb[0].mxu0
    %v1488 = vpop.f32.mrb[0].mxu0
    %1489 = vdwg.mxu0
    %1490 = vmatprep.subr.bf16.mxu0 %v1217
    %1491 = vmatpush1.bf16.msra.mxu0 %v1216
    %1492 = vmatprep.subr.bf16.mxu0 %v1219
    %1493 = vmatpush1.bf16.msra.mxu0 %v1218
    %1494 = vmatprep.subr.bf16.mxu0 %v1221
    %1495 = vmatpush1.bf16.msra.mxu0 %v1220
    %1496 = vmatprep.subr.bf16.mxu0 %v1223
    %1497 = vmatpush1.bf16.msra.mxu0 %v1222
    %1498 = vmatprep.subr.bf16.mxu0 %v1225
    %1499 = vmatpush1.bf16.msra.mxu0 %v1224
    %1500 = vmatprep.subr.bf16.mxu0 %v1227
    %1501 = vmatpush1.bf16.msra.mxu0 %v1226
    %1502 = vmatprep.subr.bf16.mxu0 %v1229
    %1503 = vmatpush1.bf16.msra.mxu0 %v1228
    %1504 = vmatprep.subr.bf16.mxu0 %v1231
    %1505 = vmatpush1.bf16.msra.mxu0 %v1230
    %1506 = vmatprep.subr.bf16.mxu0 %v1233
    %1507 = vmatpush1.bf16.msra.mxu0 %v1232
    %1508 = vmatprep.subr.bf16.mxu0 %v1235
    %1509 = vmatpush1.bf16.msra.mxu0 %v1234
    %1510 = vmatprep.subr.bf16.mxu0 %v1237
    %1511 = vmatpush1.bf16.msra.mxu0 %v1236
    %1512 = vmatprep.subr.bf16.mxu0 %v1239
    %1513 = vmatpush1.bf16.msra.mxu0 %v1238
    %1514 = vmatprep.subr.bf16.mxu0 %v1241
    %1515 = vmatpush1.bf16.msra.mxu0 %v1240
    %1516 = vmatprep.subr.bf16.mxu0 %v1243
    %1517 = vmatpush1.bf16.msra.mxu0 %v1242
    %1518 = vmatprep.subr.bf16.mxu0 %v1245
    %1519 = vmatpush1.bf16.msra.mxu0 %v1244
    %1520 = vmatprep.subr.bf16.mxu0 %v1247
    %1521 = vmatpush1.bf16.msra.mxu0 %v1246
    %1522 = vmatprep.mubr.bf16.mxu0 %v625
    %1523 = vmatmul.mubr.bf16.gmra.mrb[0].mxu0 %v624
    %v1524 = vpop.f32.mrb[0].mxu0
    %v1525 = vadd.f32 %v1484, %v1524
    %v1526 = vpop.f32.mrb[0].mxu0
    %v1527 = vadd.f32 %v1486, %v1526
    %v1528 = vpop.f32.mrb[0].mxu0
    %v1529 = vpop.f32.mrb[0].mxu0
    %1530 = vdwg.mxu0
    %1531 = vmatprep.subr.bf16.mxu0 %v1249
    %1532 = vmatpush1.bf16.msra.mxu0 %v1248
    %1533 = vmatprep.subr.bf16.mxu0 %v1251
    %1534 = vmatpush1.bf16.msra.mxu0 %v1250
    %1535 = vmatprep.subr.bf16.mxu0 %v1253
    %1536 = vmatpush1.bf16.msra.mxu0 %v1252
    %1537 = vmatprep.subr.bf16.mxu0 %v1255
    %1538 = vmatpush1.bf16.msra.mxu0 %v1254
    %1539 = vmatprep.subr.bf16.mxu0 %v1257
    %1540 = vmatpush1.bf16.msra.mxu0 %v1256
    %1541 = vmatprep.subr.bf16.mxu0 %v1259
    %1542 = vmatpush1.bf16.msra.mxu0 %v1258
    %1543 = vmatprep.subr.bf16.mxu0 %v1261
    %1544 = vmatpush1.bf16.msra.mxu0 %v1260
    %1545 = vmatprep.subr.bf16.mxu0 %v1263
    %1546 = vmatpush1.bf16.msra.mxu0 %v1262
    %1547 = vmatprep.subr.bf16.mxu0 %v1265
    %1548 = vmatpush1.bf16.msra.mxu0 %v1264
    %1549 = vmatprep.subr.bf16.mxu0 %v1267
    %1550 = vmatpush1.bf16.msra.mxu0 %v1266
    %1551 = vmatprep.subr.bf16.mxu0 %v1269
    %1552 = vmatpush1.bf16.msra.mxu0 %v1268
    %1553 = vmatprep.subr.bf16.mxu0 %v1271
    %1554 = vmatpush1.bf16.msra.mxu0 %v1270
    %1555 = vmatprep.subr.bf16.mxu0 %v1273
    %1556 = vmatpush1.bf16.msra.mxu0 %v1272
    %1557 = vmatprep.subr.bf16.mxu0 %v1275
    %1558 = vmatpush1.bf16.msra.mxu0 %v1274
    %1559 = vmatprep.subr.bf16.mxu0 %v1277
    %1560 = vmatpush1.bf16.msra.mxu0 %v1276
    %1561 = vmatprep.subr.bf16.mxu0 %v1279
    %1562 = vmatpush1.bf16.msra.mxu0 %v1278
    %1563 = vmatprep.mubr.bf16.mxu0 %v627
    %1564 = vmatmul.mubr.bf16.gmra.mrb[0].mxu0 %v626
    %v1565 = vpop.f32.mrb[0].mxu0
    %v1566 = vadd.f32 %v1525, %v1565
    %v1567 = vpop.f32.mrb[0].mxu0
    %v1568 = vadd.f32 %v1527, %v1567
    %v1569 = vpop.f32.mrb[0].mxu0
    %v1570 = vpop.f32.mrb[0].mxu0
    %1571 = vdwg.mxu0
    %v1572 = vmax.f32 %v1566, 0.0
    %v1573 = vmax.f32 %v1568, 0.0
    %v1574 = vpack.c.bf16 %v1572, %v1572
    %v1575 = vpack.c.bf16 %v1573, %v1573
    %v1576 = vld [vmem:[%s5] sm:$0xf]
    %v1577 = vld [vmem:[%s5 + $0x4] sm:$0xf]
    %v1578 = vld [vmem:[%s5 + $0x8] sm:$0xf]
    %v1579 = vld [vmem:[%s5 + $0xc] sm:$0xf]
    %v1580 = vld [vmem:[%s5 + $0x10] sm:$0xf]
    %v1581 = vld [vmem:[%s5 + $0x14] sm:$0xf]
    %v1582 = vld [vmem:[%s5 + $0x18] sm:$0xf]
    %v1583 = vld [vmem:[%s5 + $0x1c] sm:$0xf]
    %v1584 = vld [vmem:[%s5 + $0x20] sm:$0xf]
    %v1585 = vld [vmem:[%s5 + $0x24] sm:$0xf]
    %v1586 = vld [vmem:[%s5 + $0x28] sm:$0xf]
    %v1587 = vld [vmem:[%s5 + $0x2c] sm:$0xf]
    %v1588 = vld [vmem:[%s5 + $0x30] sm:$0xf]
    %v1589 = vld [vmem:[%s5 + $0x34] sm:$0xf]
    %v1590 = vld [vmem:[%s5 + $0x38] sm:$0xf]
    %v1591 = vld [vmem:[%s5 + $0x3c] sm:$0xf]
    %v1592 = vld [vmem:[%s5 + $0x40] sm:$0xf]
    %v1593 = vld [vmem:[%s5 + $0x44] sm:$0xf]
    %v1594 = vld [vmem:[%s5 + $0x48] sm:$0xf]
    %v1595 = vld [vmem:[%s5 + $0x4c] sm:$0xf]
    %v1596 = vld [vmem:[%s5 + $0x50] sm:$0xf]
    %v1597 = vld [vmem:[%s5 + $0x54] sm:$0xf]
    %v1598 = vld [vmem:[%s5 + $0x58] sm:$0xf]
    %v1599 = vld [vmem:[%s5 + $0x5c] sm:$0xf]
    %v1600 = vld [vmem:[%s5 + $0x60] sm:$0xf]
    %v1601 = vld [vmem:[%s5 + $0x64] sm:$0xf]
    %v1602 = vld [vmem:[%s5 + $0x68] sm:$0xf]
    %v1603 = vld [vmem:[%s5 + $0x6c] sm:$0xf]
    %v1604 = vld [vmem:[%s5 + $0x70] sm:$0xf]
    %v1605 = vld [vmem:[%s5 + $0x74] sm:$0xf]
    %v1606 = vld [vmem:[%s5 + $0x78] sm:$0xf]
    %v1607 = vld [vmem:[%s5 + $0x7c] sm:$0xf]
    %v1608 = vld [vmem:[%s6] sm:$0x1]
    %v1610 = vlaneseq
    %v1611 = vshrl.u32 %v1610, 7
    %v1612 = vsub.s32 0, %v1611
    %v1613 = vrot.slane %v1608, %v1612
    %v1647 = vunpack.c.l.b16 %v1576
    %v1648 = vunpack.c.l.b16 %v1577
    %v1649 = vunpack.c.l.b16 %v1578
    %v1650 = vunpack.c.l.b16 %v1579
    %v1651 = vunpack.c.l.b16 %v1580
    %v1652 = vunpack.c.l.b16 %v1581
    %v1653 = vunpack.c.l.b16 %v1582
    %v1654 = vunpack.c.l.b16 %v1583
    %v1655 = vunpack.c.l.b16 %v1584
    %v1656 = vunpack.c.l.b16 %v1585
    %v1657 = vunpack.c.l.b16 %v1586
    %v1658 = vunpack.c.l.b16 %v1587
    %v1659 = vunpack.c.l.b16 %v1588
    %v1660 = vunpack.c.l.b16 %v1589
    %v1661 = vunpack.c.l.b16 %v1590
    %v1662 = vunpack.c.l.b16 %v1591
    %v1663 = vunpack.c.l.b16 %v1592
    %v1664 = vunpack.c.l.b16 %v1593
    %v1665 = vunpack.c.l.b16 %v1594
    %v1666 = vunpack.c.l.b16 %v1595
    %v1667 = vunpack.c.l.b16 %v1596
    %v1668 = vunpack.c.l.b16 %v1597
    %v1669 = vunpack.c.l.b16 %v1598
    %v1670 = vunpack.c.l.b16 %v1599
    %v1671 = vunpack.c.l.b16 %v1600
    %v1672 = vunpack.c.l.b16 %v1601
    %v1673 = vunpack.c.l.b16 %v1602
    %v1674 = vunpack.c.l.b16 %v1603
    %v1675 = vunpack.c.l.b16 %v1604
    %v1676 = vunpack.c.l.b16 %v1605
    %v1677 = vunpack.c.l.b16 %v1606
    %v1678 = vunpack.c.l.b16 %v1607
    %v1679 = vpack.c.b16 %v1648, %v1647
    %v1680 = vpack.c.b16 %v1650, %v1649
    %v1681 = vpack.c.b16 %v1652, %v1651
    %v1682 = vpack.c.b16 %v1654, %v1653
    %v1683 = vpack.c.b16 %v1656, %v1655
    %v1684 = vpack.c.b16 %v1658, %v1657
    %v1685 = vpack.c.b16 %v1660, %v1659
    %v1686 = vpack.c.b16 %v1662, %v1661
    %v1687 = vpack.c.b16 %v1664, %v1663
    %v1688 = vpack.c.b16 %v1666, %v1665
    %v1689 = vpack.c.b16 %v1668, %v1667
    %v1690 = vpack.c.b16 %v1670, %v1669
    %v1691 = vpack.c.b16 %v1672, %v1671
    %v1692 = vpack.c.b16 %v1674, %v1673
    %v1693 = vpack.c.b16 %v1676, %v1675
    %v1694 = vpack.c.b16 %v1678, %v1677
    %1711 = vmatprep.subr.bf16.mxu0 0
    %1712 = vmatpush1.bf16.msra.mxu0 %v1679
    %1713 = vmatprep.subr.bf16.mxu0 0
    %1714 = vmatpush1.bf16.msra.mxu0 %v1680
    %1715 = vmatprep.subr.bf16.mxu0 0
    %1716 = vmatpush1.bf16.msra.mxu0 %v1681
    %1717 = vmatprep.subr.bf16.mxu0 0
    %1718 = vmatpush1.bf16.msra.mxu0 %v1682
    %1719 = vmatprep.subr.bf16.mxu0 0
    %1720 = vmatpush1.bf16.msra.mxu0 %v1683
    %1721 = vmatprep.subr.bf16.mxu0 0
    %1722 = vmatpush1.bf16.msra.mxu0 %v1684
    %1723 = vmatprep.subr.bf16.mxu0 0
    %1724 = vmatpush1.bf16.msra.mxu0 %v1685
    %1725 = vmatprep.subr.bf16.mxu0 0
    %1726 = vmatpush1.bf16.msra.mxu0 %v1686
    %1727 = vmatprep.subr.bf16.mxu0 0
    %1728 = vmatpush1.bf16.msra.mxu0 %v1687
    %1729 = vmatprep.subr.bf16.mxu0 0
    %1730 = vmatpush1.bf16.msra.mxu0 %v1688
    %1731 = vmatprep.subr.bf16.mxu0 0
    %1732 = vmatpush1.bf16.msra.mxu0 %v1689
    %1733 = vmatprep.subr.bf16.mxu0 0
    %1734 = vmatpush1.bf16.msra.mxu0 %v1690
    %1735 = vmatprep.subr.bf16.mxu0 0
    %1736 = vmatpush1.bf16.msra.mxu0 %v1691
    %1737 = vmatprep.subr.bf16.mxu0 0
    %1738 = vmatpush1.bf16.msra.mxu0 %v1692
    %1739 = vmatprep.subr.bf16.mxu0 0
    %1740 = vmatpush1.bf16.msra.mxu0 %v1693
    %1741 = vmatprep.subr.bf16.mxu0 0
    %1742 = vmatpush1.bf16.msra.mxu0 %v1694
    %1743 = vmatprep.mubr.bf16.mxu0 %v1575
    %1744 = vmatmul.mubr.bf16.gmra.mrb[0].mxu0 %v1574
    %v1745 = vpop.f32.mrb[0].mxu0
    %v1746 = vadd.f32 %v1613, %v1745
    %v1747 = vpop.f32.mrb[0].mxu0
    %v1748 = vpop.f32.mrb[0].mxu0
    %v1749 = vpop.f32.mrb[0].mxu0
    %1750 = vdwg.mxu0
    %1751 = vst [vmem:[#allocation2] sm:$0x3] %v1746
    // Predicated region
    $region30: #{efficientnet_b4_transfer.3} parent=1 // pred_check
      _
    $region31: #{efficientnet_b4_transfer.3} parent=1 // pred_check_branch
      %1753 = sbr.rel (0) target = $region33
    $region32: #{efficientnet_b4_transfer.3} parent=1 // pred_region
      %s1755 = ssub.s32 32, 32
      %1756 = vsyncadd [#allocation3], %s1755
      %s1758 = sshll.u32 [#allocation2], 4
      %s1759 = int_to_ptr.vmem [resolvable:$true] %s1758
      %1761 = dma.vmem_to_hbm [thread:$0]  %s1759, 32, %s7, [#allocation3]
    $region33: #{efficientnet_b4_transfer.3} parent=1 // pred_fallthru
      _
    // Predicated region
    $region34: #{efficientnet_b4_transfer.3} parent=1 // pred_check
      _
    $region35: #{efficientnet_b4_transfer.3} parent=1 // pred_check_branch
      %1763 = sbr.rel (0) target = $region37
    $region36: #{efficientnet_b4_transfer.3} parent=1 // pred_region
      %1764 = dma.done [#allocation3], 32
    $region37: #{efficientnet_b4_transfer.3} parent=1 // pred_fallthru
      _
    %1765 = vsyncpa [#allocation3], 1

</llo_original>
